<compile_context>
chip_gen: v7x
topology: tpu7x:2x2x1
jax: 0.10.0
libtpu: 0.0.40
codegen_flags: <defaults>
</compile_context>

<pallas_src>
import functools

import jax
import jax.numpy as jnp
from jax import lax
from jax.experimental import pallas as pl
from jax.experimental.pallas import tpu as pltpu


def m2_kernel(nheads,
              x_ref,                       # [B, T, H]  (tok + pos emb, full batch)
              wqkv_ref, bqkv_ref,          # [H, 3H], [1, 3H]  (prj1 + scale folded in)
              w1_ref, b1_ref,              # [H, H], [1, H]
              w2_ref, b2_ref,              # [H, V], [1, V]
              out_ref,                     # [B*T, V]
              y_ref):                      # VMEM scratch [B, T, H]
    B, T, H = x_ref.shape
    V = w2_ref.shape[1]
    Hd = H // nheads

    # ---- fused QKV projection on the flattened [B*T, H] slab --------------
    xf = x_ref[...].reshape(B * T, H)
    qkv = jnp.dot(xf, wqkv_ref[...], preferred_element_type=jnp.float32) + bqkv_ref[...]
    q = qkv[:, 0 * H:1 * H].reshape(B, T, H)     # scale already folded into wq'/bq'
    k = qkv[:, 1 * H:2 * H].reshape(B, T, H)
    v = qkv[:, 2 * H:3 * H].reshape(B, T, H)

    # ---- causal mask: built once per invocation, hoisted out of head loop --
    row = lax.broadcasted_iota(jnp.int32, (T, T), 0)
    col = lax.broadcasted_iota(jnp.int32, (T, T), 1)
    keep = jnp.broadcast_to((row >= col)[None, :, :], (B, T, T))
    neg = jnp.float32(-1e30)   # large finite negative (padding-safe, exp -> 0)

    # ---- per-head masked attention, batched over B -------------------------
    for h in range(nheads):                       # static loop over heads
        sl = slice(h * Hd, (h + 1) * Hd)
        qh = q[:, :, sl]                          # [B, T, Hd]
        kh = k[:, :, sl]
        vh = v[:, :, sl]
        att = jnp.einsum('btd,bsd->bts', qh, kh,
                         preferred_element_type=jnp.float32)        # [B, T, T]
        att = jnp.where(keep, att, neg)
        att = att - jnp.max(att, axis=-1, keepdims=True)
        p = jnp.exp(att)
        inv = pl.reciprocal(jnp.sum(p, axis=-1, keepdims=True), approx=True)
        p = p * inv
        y_ref[:, :, sl] = jnp.einsum('bts,bsd->btd', p, vh,
                                     preferred_element_type=jnp.float32)

    # ---- MLP: Linear(H,H) -> ReLU -> Linear(H,V) -> ReLU -------------------
    yf = y_ref[...].reshape(B * T, H)
    z = jnp.maximum(jnp.dot(yf, w1_ref[...], preferred_element_type=jnp.float32)
                    + b1_ref[...], 0.0)
    o = jnp.maximum(jnp.dot(z, w2_ref[...], preferred_element_type=jnp.float32)
                    + b2_ref[...], 0.0)
    out_ref[...] = o.astype(out_ref.dtype)


def m2_forward(ixs, params, *, nheads):
    # Glue kept outside the kernel: embedding gather + positional-emb add.
    tok = params["tok_emb"][ixs]                                   # [B, T, H]
    B, T, H = tok.shape
    x = tok + params["pos_emb"][:, :T, :]
    V = params["w2"].shape[1]

    # Algebraic folds (exact): prj1 into Q/K/V, attention scale into Q.
    scale = 1.0 / (float(H) ** 0.5)     # torch scales by sqrt(allH), not sqrt(head_dim)
    wprj = params["wprj"]
    wq_f = (wprj @ params["wq"]) * scale
    bq_f = params["bq"] * scale
    wk_f = wprj @ params["wk"]
    wv_f = wprj @ params["wv"]
    wqkv = jnp.concatenate([wq_f, wk_f, wv_f], axis=1)                     # [H, 3H]
    bqkv = jnp.concatenate([bq_f, params["bk"], params["bv"]], axis=1)     # [1, 3H]

    kernel = functools.partial(m2_kernel, nheads)
    out_flat = pl.pallas_call(
        kernel,
        out_shape=jax.ShapeDtypeStruct((B * T, V), jnp.float32),
        scratch_shapes=[pltpu.VMEM((B, T, H), jnp.float32)],       # per-head output slab
    )(x, wqkv, bqkv, params["w1"], params["b1"], params["w2"], params["b2"])
    return out_flat.reshape(B, T, V)


def ref_forward(ixs, p, *, nheads):
    # Pure-JAX reference mirroring the PyTorch module (un-fused, un-folded).
    tok = p["tok_emb"][ixs]
    B, T, H = tok.shape
    x = tok + p["pos_emb"][:, :T, :]
    x = x @ p["wprj"]
    q = x @ p["wq"] + p["bq"][0]
    k = x @ p["wk"] + p["bk"][0]
    v = x @ p["wv"] + p["bv"][0]
    Hd = H // nheads
    split = lambda a: a.reshape(B, T, nheads, Hd).transpose(0, 2, 1, 3)
    qh, kh, vh = split(q), split(k), split(v)
    att = jnp.einsum("bhtd,bhsd->bhts", qh, kh) / (float(H) ** 0.5)
    mask = jnp.tril(jnp.ones((T, T)))
    att = jnp.where(mask == 0, -jnp.inf, att)
    w = jax.nn.softmax(att, axis=-1)
    y = jnp.einsum("bhts,bhsd->bhtd", w, vh).transpose(0, 2, 1, 3).reshape(B, T, H)
    z = jnp.maximum(y @ p["w1"] + p["b1"][0], 0.0)
    return jnp.maximum(z @ p["w2"] + p["b2"][0], 0.0)


if __name__ == "__main__":
    # Hyperparameters implied by the module
    vocab_size = 16
    h_dim = 32
    block_size = 8
    nhead = 4
    B, T = 2, block_size

    key = jax.random.PRNGKey(0)
    ks = jax.random.split(key, 16)

    def rnd(k, shape, scale=0.1):
        return (scale * jax.random.normal(k, shape)).astype(jnp.float32)

    params = {
        "tok_emb": rnd(ks[0], (vocab_size, h_dim), 1.0),
        "pos_emb": rnd(ks[1], (1, block_size, h_dim), 0.02),
        "wprj":    rnd(ks[2], (h_dim, h_dim)),                # Linear weights stored as [in, out]
        "wq":      rnd(ks[3], (h_dim, h_dim)),
        "bq":      rnd(ks[4], (1, h_dim)),
        "wk":      rnd(ks[5], (h_dim, h_dim)),
        "bk":      rnd(ks[6], (1, h_dim)),
        "wv":      rnd(ks[7], (h_dim, h_dim)),
        "bv":      rnd(ks[8], (1, h_dim)),
        "w1":      rnd(ks[9], (h_dim, h_dim)),
        "b1":      rnd(ks[10], (1, h_dim)),
        "w2":      rnd(ks[11], (h_dim, vocab_size)),
        "b2":      rnd(ks[12], (1, vocab_size)),
    }

    ixs = jax.random.randint(ks[13], (B, T), 0, vocab_size, dtype=jnp.int32)

    out = m2_forward(ixs, params, nheads=nhead)
    out = jax.block_until_ready(out)

    ref = ref_forward(ixs, params, nheads=nhead)
    assert out.shape == (B, T, vocab_size)
    # Tolerance relaxed slightly (1e-3) to accommodate the EUP approx
    # reciprocal in the softmax normalization and the exact algebraic folds.
    assert jnp.allclose(out, ref, atol=1e-3, rtol=1e-3), "mismatch vs. pure-JAX reference"

    print("KERNEL_OK")
</pallas_src>

<mosaic_0001>
module attributes {stable_mosaic.version = 11 : i64} {
  func.func @m2_kernel(%arg0: memref<2x8x32xf32, #tpu.memory_space<vmem>>, %arg1: memref<32x96xf32, #tpu.memory_space<vmem>>, %arg2: memref<1x96xf32, #tpu.memory_space<vmem>>, %arg3: memref<32x32xf32, #tpu.memory_space<vmem>>, %arg4: memref<1x32xf32, #tpu.memory_space<vmem>>, %arg5: memref<32x16xf32, #tpu.memory_space<vmem>>, %arg6: memref<1x16xf32, #tpu.memory_space<vmem>>, %arg7: memref<16x16xf32, #tpu.memory_space<vmem>>, %arg8: memref<2x8x32xf32, #tpu.memory_space<vmem>>) attributes {dimension_semantics = [], scalar_prefetch = 0 : i64, scratch_operands = 1 : i64, tpu.core_type = #tpu.core_type<tc>} {
    %c0 = arith.constant 0 : index
    %c0_0 = arith.constant 0 : index
    %c0_1 = arith.constant 0 : index
    %0 = vector.load %arg0[%c0, %c0_0, %c0_1] : memref<2x8x32xf32, #tpu.memory_space<vmem>>, vector<2x8x32xf32>
    %1 = vector.shape_cast %0 : vector<2x8x32xf32> to vector<16x32xf32>
    %c0_2 = arith.constant 0 : index
    %c0_3 = arith.constant 0 : index
    %2 = vector.load %arg1[%c0_2, %c0_3] : memref<32x96xf32, #tpu.memory_space<vmem>>, vector<32x96xf32>
    %cst = arith.constant dense<0.000000e+00> : vector<16x96xf32>
    %3 = tpu.matmul %1, %2, %cst {dimension_numbers = #tpu.dot_dimension_numbers<[1], [0], [0], [1], [0, 0, 1, 1], [], []>} : vector<16x32xf32>, vector<32x96xf32>, vector<16x96xf32> -> vector<16x96xf32>
    %c0_4 = arith.constant 0 : index
    %c0_5 = arith.constant 0 : index
    %4 = vector.load %arg2[%c0_4, %c0_5] : memref<1x96xf32, #tpu.memory_space<vmem>>, vector<1x96xf32>
    %5 = vector.broadcast %4 : vector<1x96xf32> to vector<16x96xf32>
    %6 = arith.addf %3, %5 : vector<16x96xf32>
    %7 = vector.extract_strided_slice %6 {offsets = [0, 0], sizes = [16, 32], strides = [1, 1]} : vector<16x96xf32> to vector<16x32xf32>
    %8 = vector.shape_cast %7 : vector<16x32xf32> to vector<2x8x32xf32>
    %9 = vector.extract_strided_slice %6 {offsets = [0, 32], sizes = [16, 32], strides = [1, 1]} : vector<16x96xf32> to vector<16x32xf32>
    %10 = vector.shape_cast %9 : vector<16x32xf32> to vector<2x8x32xf32>
    %11 = vector.extract_strided_slice %6 {offsets = [0, 64], sizes = [16, 32], strides = [1, 1]} : vector<16x96xf32> to vector<16x32xf32>
    %12 = vector.shape_cast %11 : vector<16x32xf32> to vector<2x8x32xf32>
    %13 = tpu.iota {dimensions = array<i32: 0>} : vector<8x8xi32>
    %14 = tpu.iota {dimensions = array<i32: 1>} : vector<8x8xi32>
    %15 = arith.cmpi sge, %13, %14 : vector<8x8xi32>
    %16 = vector.shape_cast %15 : vector<8x8xi1> to vector<1x8x8xi1>
    %17 = vector.shape_cast %16 : vector<1x8x8xi1> to vector<1x8x8xi1>
    %18 = vector.broadcast %17 : vector<1x8x8xi1> to vector<2x8x8xi1>
    %19 = vector.extract_strided_slice %8 {offsets = [0, 0, 0], sizes = [2, 8, 8], strides = [1, 1, 1]} : vector<2x8x32xf32> to vector<2x8x8xf32>
    %20 = vector.extract_strided_slice %10 {offsets = [0, 0, 0], sizes = [2, 8, 8], strides = [1, 1, 1]} : vector<2x8x32xf32> to vector<2x8x8xf32>
    %21 = vector.extract_strided_slice %12 {offsets = [0, 0, 0], sizes = [2, 8, 8], strides = [1, 1, 1]} : vector<2x8x32xf32> to vector<2x8x8xf32>
    "tpu.trace_start"() <{level = 10 : i32, message = "btd,bsd->bts"}> : () -> ()
    %cst_6 = arith.constant dense<0.000000e+00> : vector<2x8x8xf32>
    %22 = tpu.matmul %19, %20, %cst_6 {dimension_numbers = #tpu.dot_dimension_numbers<[2], [2], [1], [1], [0, 0, 0, 1, 1, 1], [0], [0]>} : vector<2x8x8xf32>, vector<2x8x8xf32>, vector<2x8x8xf32> -> vector<2x8x8xf32>
    %cst_7 = arith.constant -1.000000e+30 : f32
    "tpu.trace_stop"() : () -> ()
    %23 = vector.broadcast %cst_7 : f32 to vector<2x8x8xf32>
    %24 = arith.select %18, %22, %23 : vector<2x8x8xi1>, vector<2x8x8xf32>
    %cst_8 = arith.constant dense<0xFF800000> : vector<2x8xf32>
    %25 = vector.multi_reduction <maximumf>, %24, %cst_8 [2] : vector<2x8x8xf32> to vector<2x8xf32>
    %26 = vector.shape_cast %25 : vector<2x8xf32> to vector<2x8x1xf32>
    %27 = vector.broadcast %26 : vector<2x8x1xf32> to vector<2x8x8xf32>
    %28 = arith.subf %24, %27 : vector<2x8x8xf32>
    %29 = math.exp %28 : vector<2x8x8xf32>
    %cst_9 = arith.constant dense<0.000000e+00> : vector<2x8xf32>
    %30 = vector.multi_reduction <add>, %29, %cst_9 [2] : vector<2x8x8xf32> to vector<2x8xf32>
    %31 = vector.shape_cast %30 : vector<2x8xf32> to vector<2x8x1xf32>
    %32 = tpu.reciprocal %31 {approx = true} : vector<2x8x1xf32> -> vector<2x8x1xf32>
    %33 = vector.broadcast %32 : vector<2x8x1xf32> to vector<2x8x8xf32>
    %34 = arith.mulf %29, %33 : vector<2x8x8xf32>
    "tpu.trace_start"() <{level = 10 : i32, message = "bts,bsd->btd"}> : () -> ()
    %cst_10 = arith.constant dense<0.000000e+00> : vector<2x8x8xf32>
    %35 = tpu.matmul %34, %21, %cst_10 {dimension_numbers = #tpu.dot_dimension_numbers<[2], [1], [1], [2], [0, 0, 0, 1, 1, 2], [0], [0]>} : vector<2x8x8xf32>, vector<2x8x8xf32>, vector<2x8x8xf32> -> vector<2x8x8xf32>
    "tpu.trace_stop"() : () -> ()
    %c0_11 = arith.constant 0 : index
    %c0_12 = arith.constant 0 : index
    %c0_13 = arith.constant 0 : index
    %36 = vector.load %arg8[%c0_11, %c0_12, %c0_13] : memref<2x8x32xf32, #tpu.memory_space<vmem>>, vector<2x8x8xf32>
    tpu.vector_store %arg8[%c0_11, %c0_12, %c0_13], %35 {strides = array<i32>} : memref<2x8x32xf32, #tpu.memory_space<vmem>>, vector<2x8x8xf32>,
    %37 = vector.extract_strided_slice %8 {offsets = [0, 0, 8], sizes = [2, 8, 8], strides = [1, 1, 1]} : vector<2x8x32xf32> to vector<2x8x8xf32>
    %38 = vector.extract_strided_slice %10 {offsets = [0, 0, 8], sizes = [2, 8, 8], strides = [1, 1, 1]} : vector<2x8x32xf32> to vector<2x8x8xf32>
    %39 = vector.extract_strided_slice %12 {offsets = [0, 0, 8], sizes = [2, 8, 8], strides = [1, 1, 1]} : vector<2x8x32xf32> to vector<2x8x8xf32>
    "tpu.trace_start"() <{level = 10 : i32, message = "btd,bsd->bts"}> : () -> ()
    %cst_14 = arith.constant dense<0.000000e+00> : vector<2x8x8xf32>
    %40 = tpu.matmul %37, %38, %cst_14 {dimension_numbers = #tpu.dot_dimension_numbers<[2], [2], [1], [1], [0, 0, 0, 1, 1, 1], [0], [0]>} : vector<2x8x8xf32>, vector<2x8x8xf32>, vector<2x8x8xf32> -> vector<2x8x8xf32>
    %cst_15 = arith.constant -1.000000e+30 : f32
    "tpu.trace_stop"() : () -> ()
    %41 = vector.broadcast %cst_15 : f32 to vector<2x8x8xf32>
    %42 = arith.select %18, %40, %41 : vector<2x8x8xi1>, vector<2x8x8xf32>
    %cst_16 = arith.constant dense<0xFF800000> : vector<2x8xf32>
    %43 = vector.multi_reduction <maximumf>, %42, %cst_16 [2] : vector<2x8x8xf32> to vector<2x8xf32>
    %44 = vector.shape_cast %43 : vector<2x8xf32> to vector<2x8x1xf32>
    %45 = vector.broadcast %44 : vector<2x8x1xf32> to vector<2x8x8xf32>
    %46 = arith.subf %42, %45 : vector<2x8x8xf32>
    %47 = math.exp %46 : vector<2x8x8xf32>
    %cst_17 = arith.constant dense<0.000000e+00> : vector<2x8xf32>
    %48 = vector.multi_reduction <add>, %47, %cst_17 [2] : vector<2x8x8xf32> to vector<2x8xf32>
    %49 = vector.shape_cast %48 : vector<2x8xf32> to vector<2x8x1xf32>
    %50 = tpu.reciprocal %49 {approx = true} : vector<2x8x1xf32> -> vector<2x8x1xf32>
    %51 = vector.broadcast %50 : vector<2x8x1xf32> to vector<2x8x8xf32>
    %52 = arith.mulf %47, %51 : vector<2x8x8xf32>
    "tpu.trace_start"() <{level = 10 : i32, message = "bts,bsd->btd"}> : () -> ()
    %cst_18 = arith.constant dense<0.000000e+00> : vector<2x8x8xf32>
    %53 = tpu.matmul %52, %39, %cst_18 {dimension_numbers = #tpu.dot_dimension_numbers<[2], [1], [1], [2], [0, 0, 0, 1, 1, 2], [0], [0]>} : vector<2x8x8xf32>, vector<2x8x8xf32>, vector<2x8x8xf32> -> vector<2x8x8xf32>
    "tpu.trace_stop"() : () -> ()
    %c0_19 = arith.constant 0 : index
    %c0_20 = arith.constant 0 : index
    %c8 = arith.constant 8 : index
    %54 = vector.load %arg8[%c0_19, %c0_20, %c8] : memref<2x8x32xf32, #tpu.memory_space<vmem>>, vector<2x8x8xf32>
    tpu.vector_store %arg8[%c0_19, %c0_20, %c8], %53 {strides = array<i32>} : memref<2x8x32xf32, #tpu.memory_space<vmem>>, vector<2x8x8xf32>,
    %55 = vector.extract_strided_slice %8 {offsets = [0, 0, 16], sizes = [2, 8, 8], strides = [1, 1, 1]} : vector<2x8x32xf32> to vector<2x8x8xf32>
    %56 = vector.extract_strided_slice %10 {offsets = [0, 0, 16], sizes = [2, 8, 8], strides = [1, 1, 1]} : vector<2x8x32xf32> to vector<2x8x8xf32>
    %57 = vector.extract_strided_slice %12 {offsets = [0, 0, 16], sizes = [2, 8, 8], strides = [1, 1, 1]} : vector<2x8x32xf32> to vector<2x8x8xf32>
    "tpu.trace_start"() <{level = 10 : i32, message = "btd,bsd->bts"}> : () -> ()
    %cst_21 = arith.constant dense<0.000000e+00> : vector<2x8x8xf32>
    %58 = tpu.matmul %55, %56, %cst_21 {dimension_numbers = #tpu.dot_dimension_numbers<[2], [2], [1], [1], [0, 0, 0, 1, 1, 1], [0], [0]>} : vector<2x8x8xf32>, vector<2x8x8xf32>, vector<2x8x8xf32> -> vector<2x8x8xf32>
    %cst_22 = arith.constant -1.000000e+30 : f32
    "tpu.trace_stop"() : () -> ()
    %59 = vector.broadcast %cst_22 : f32 to vector<2x8x8xf32>
    %60 = arith.select %18, %58, %59 : vector<2x8x8xi1>, vector<2x8x8xf32>
    %cst_23 = arith.constant dense<0xFF800000> : vector<2x8xf32>
    %61 = vector.multi_reduction <maximumf>, %60, %cst_23 [2] : vector<2x8x8xf32> to vector<2x8xf32>
    %62 = vector.shape_cast %61 : vector<2x8xf32> to vector<2x8x1xf32>
    %63 = vector.broadcast %62 : vector<2x8x1xf32> to vector<2x8x8xf32>
    %64 = arith.subf %60, %63 : vector<2x8x8xf32>
    %65 = math.exp %64 : vector<2x8x8xf32>
    %cst_24 = arith.constant dense<0.000000e+00> : vector<2x8xf32>
    %66 = vector.multi_reduction <add>, %65, %cst_24 [2] : vector<2x8x8xf32> to vector<2x8xf32>
    %67 = vector.shape_cast %66 : vector<2x8xf32> to vector<2x8x1xf32>
    %68 = tpu.reciprocal %67 {approx = true} : vector<2x8x1xf32> -> vector<2x8x1xf32>
    %69 = vector.broadcast %68 : vector<2x8x1xf32> to vector<2x8x8xf32>
    %70 = arith.mulf %65, %69 : vector<2x8x8xf32>
    "tpu.trace_start"() <{level = 10 : i32, message = "bts,bsd->btd"}> : () -> ()
    %cst_25 = arith.constant dense<0.000000e+00> : vector<2x8x8xf32>
    %71 = tpu.matmul %70, %57, %cst_25 {dimension_numbers = #tpu.dot_dimension_numbers<[2], [1], [1], [2], [0, 0, 0, 1, 1, 2], [0], [0]>} : vector<2x8x8xf32>, vector<2x8x8xf32>, vector<2x8x8xf32> -> vector<2x8x8xf32>
    "tpu.trace_stop"() : () -> ()
    %c0_26 = arith.constant 0 : index
    %c0_27 = arith.constant 0 : index
    %c16 = arith.constant 16 : index
    %72 = vector.load %arg8[%c0_26, %c0_27, %c16] : memref<2x8x32xf32, #tpu.memory_space<vmem>>, vector<2x8x8xf32>
    tpu.vector_store %arg8[%c0_26, %c0_27, %c16], %71 {strides = array<i32>} : memref<2x8x32xf32, #tpu.memory_space<vmem>>, vector<2x8x8xf32>,
    %73 = vector.extract_strided_slice %8 {offsets = [0, 0, 24], sizes = [2, 8, 8], strides = [1, 1, 1]} : vector<2x8x32xf32> to vector<2x8x8xf32>
    %74 = vector.extract_strided_slice %10 {offsets = [0, 0, 24], sizes = [2, 8, 8], strides = [1, 1, 1]} : vector<2x8x32xf32> to vector<2x8x8xf32>
    %75 = vector.extract_strided_slice %12 {offsets = [0, 0, 24], sizes = [2, 8, 8], strides = [1, 1, 1]} : vector<2x8x32xf32> to vector<2x8x8xf32>
    "tpu.trace_start"() <{level = 10 : i32, message = "btd,bsd->bts"}> : () -> ()
    %cst_28 = arith.constant dense<0.000000e+00> : vector<2x8x8xf32>
    %76 = tpu.matmul %73, %74, %cst_28 {dimension_numbers = #tpu.dot_dimension_numbers<[2], [2], [1], [1], [0, 0, 0, 1, 1, 1], [0], [0]>} : vector<2x8x8xf32>, vector<2x8x8xf32>, vector<2x8x8xf32> -> vector<2x8x8xf32>
    %cst_29 = arith.constant -1.000000e+30 : f32
    "tpu.trace_stop"() : () -> ()
    %77 = vector.broadcast %cst_29 : f32 to vector<2x8x8xf32>
    %78 = arith.select %18, %76, %77 : vector<2x8x8xi1>, vector<2x8x8xf32>
    %cst_30 = arith.constant dense<0xFF800000> : vector<2x8xf32>
    %79 = vector.multi_reduction <maximumf>, %78, %cst_30 [2] : vector<2x8x8xf32> to vector<2x8xf32>
    %80 = vector.shape_cast %79 : vector<2x8xf32> to vector<2x8x1xf32>
    %81 = vector.broadcast %80 : vector<2x8x1xf32> to vector<2x8x8xf32>
    %82 = arith.subf %78, %81 : vector<2x8x8xf32>
    %83 = math.exp %82 : vector<2x8x8xf32>
    %cst_31 = arith.constant dense<0.000000e+00> : vector<2x8xf32>
    %84 = vector.multi_reduction <add>, %83, %cst_31 [2] : vector<2x8x8xf32> to vector<2x8xf32>
    %85 = vector.shape_cast %84 : vector<2x8xf32> to vector<2x8x1xf32>
    %86 = tpu.reciprocal %85 {approx = true} : vector<2x8x1xf32> -> vector<2x8x1xf32>
    %87 = vector.broadcast %86 : vector<2x8x1xf32> to vector<2x8x8xf32>
    %88 = arith.mulf %83, %87 : vector<2x8x8xf32>
    "tpu.trace_start"() <{level = 10 : i32, message = "bts,bsd->btd"}> : () -> ()
    %cst_32 = arith.constant dense<0.000000e+00> : vector<2x8x8xf32>
    %89 = tpu.matmul %88, %75, %cst_32 {dimension_numbers = #tpu.dot_dimension_numbers<[2], [1], [1], [2], [0, 0, 0, 1, 1, 2], [0], [0]>} : vector<2x8x8xf32>, vector<2x8x8xf32>, vector<2x8x8xf32> -> vector<2x8x8xf32>
    "tpu.trace_stop"() : () -> ()
    %c0_33 = arith.constant 0 : index
    %c0_34 = arith.constant 0 : index
    %c24 = arith.constant 24 : index
    %90 = vector.load %arg8[%c0_33, %c0_34, %c24] : memref<2x8x32xf32, #tpu.memory_space<vmem>>, vector<2x8x8xf32>
    tpu.vector_store %arg8[%c0_33, %c0_34, %c24], %89 {strides = array<i32>} : memref<2x8x32xf32, #tpu.memory_space<vmem>>, vector<2x8x8xf32>,
    %c0_35 = arith.constant 0 : index
    %c0_36 = arith.constant 0 : index
    %c0_37 = arith.constant 0 : index
    %91 = vector.load %arg8[%c0_35, %c0_36, %c0_37] : memref<2x8x32xf32, #tpu.memory_space<vmem>>, vector<2x8x32xf32>
    %92 = vector.shape_cast %91 : vector<2x8x32xf32> to vector<16x32xf32>
    %c0_38 = arith.constant 0 : index
    %c0_39 = arith.constant 0 : index
    %93 = vector.load %arg3[%c0_38, %c0_39] : memref<32x32xf32, #tpu.memory_space<vmem>>, vector<32x32xf32>
    %cst_40 = arith.constant dense<0.000000e+00> : vector<16x32xf32>
    %94 = tpu.matmul %92, %93, %cst_40 {dimension_numbers = #tpu.dot_dimension_numbers<[1], [0], [0], [1], [0, 0, 1, 1], [], []>} : vector<16x32xf32>, vector<32x32xf32>, vector<16x32xf32> -> vector<16x32xf32>
    %c0_41 = arith.constant 0 : index
    %c0_42 = arith.constant 0 : index
    %95 = vector.load %arg4[%c0_41, %c0_42] : memref<1x32xf32, #tpu.memory_space<vmem>>, vector<1x32xf32>
    %96 = vector.broadcast %95 : vector<1x32xf32> to vector<16x32xf32>
    %97 = arith.addf %94, %96 : vector<16x32xf32>
    %cst_43 = arith.constant 0.000000e+00 : f32
    %98 = vector.broadcast %cst_43 : f32 to vector<16x32xf32>
    %99 = arith.maximumf %97, %98 : vector<16x32xf32>
    %c0_44 = arith.constant 0 : index
    %c0_45 = arith.constant 0 : index
    %100 = vector.load %arg5[%c0_44, %c0_45] : memref<32x16xf32, #tpu.memory_space<vmem>>, vector<32x16xf32>
    %cst_46 = arith.constant dense<0.000000e+00> : vector<16x16xf32>
    %101 = tpu.matmul %99, %100, %cst_46 {dimension_numbers = #tpu.dot_dimension_numbers<[1], [0], [0], [1], [0, 0, 1, 1], [], []>} : vector<16x32xf32>, vector<32x16xf32>, vector<16x16xf32> -> vector<16x16xf32>
    %c0_47 = arith.constant 0 : index
    %c0_48 = arith.constant 0 : index
    %102 = vector.load %arg6[%c0_47, %c0_48] : memref<1x16xf32, #tpu.memory_space<vmem>>, vector<1x16xf32>
    %103 = vector.broadcast %102 : vector<1x16xf32> to vector<16x16xf32>
    %104 = arith.addf %101, %103 : vector<16x16xf32>
    %cst_49 = arith.constant 0.000000e+00 : f32
    %105 = vector.broadcast %cst_49 : f32 to vector<16x16xf32>
    %106 = arith.maximumf %104, %105 : vector<16x16xf32>
    %c0_50 = arith.constant 0 : index
    %c0_51 = arith.constant 0 : index
    %107 = vector.load %arg7[%c0_50, %c0_51] : memref<16x16xf32, #tpu.memory_space<vmem>>, vector<16x16xf32>
    tpu.vector_store %arg7[%c0_50, %c0_51], %106 {strides = array<i32>} : memref<16x16xf32, #tpu.memory_space<vmem>>, vector<16x16xf32>,
    return
  }
}

</mosaic_0001>

<llo_original>
// kernel: tpu_custom_call.1
$region0: #{tpu_custom_call.1}
  #allocation0 [shape = 'u32[]', space=smem, size = 0x4, offset = 0x4, fixed_abs, tag = 'smem constant byte address 0x4 - core index']
  #allocation1 [shape = 'u32[144,128]{1,0:T(1,128)}', space=vmem, size = 0x12000, scoped, tag = 'internal scratch']
  #allocation2 [shape = 'f32[2,8,32]{2,1,0:T(8,128)}', space=vmem, size = 0x2000, scoped, tag = 'scratch operand']
  %s0 = inlined_call_operand.vmem [shape: f32[2,8,32], index: 0, kind: input, shape index: {}]
  %s1 = inlined_call_operand.vmem [shape: f32[32,96], index: 1, kind: input, shape index: {}]
  %s2 = inlined_call_operand.vmem [shape: f32[1,96], index: 2, kind: input, shape index: {}]
  %s3 = inlined_call_operand.hbm [shape: f32[32,32], index: 3, kind: input, shape index: {}]
  %s4 = inlined_call_operand.vmem [shape: f32[1,32], index: 4, kind: input, shape index: {}]
  %s5 = inlined_call_operand.vmem [shape: f32[32,16], index: 5, kind: input, shape index: {}]
  %s6 = inlined_call_operand.vmem [shape: f32[1,16], index: 6, kind: input, shape index: {}]
  %s7 = inlined_call_operand.hbm [shape: f32[16,16], index: 7, kind: output, shape index: {}]
  %s8 = sld [smem:[#allocation0]]
  $region42: #{tpu_custom_call.1} parent=0
    _
  %s10 = ssub.s32 1, %s8
  %s11 = scalar_select 0, %s10, %s8
  $region1: #{tpu_custom_call.1} parent=0
    #allocation3 [shape = 'u8[16384]{0}', space=vmem, size = 0x4000, scoped, tag = 'input window, operand 3, single buffered']
    #allocation4 [shape = 's32[1]{0}', space=sflag, size = 0x4, scoped, tag = 'scoped memory for tpu_custom_call.1']
    #allocation5 [shape = 's32[1]{0}', space=sflag, size = 0x4, scoped, tag = 'scoped memory for tpu_custom_call.1']
    #allocation6 [shape = 'u8[8192]{0}', space=vmem, size = 0x2000, scoped, tag = 'output window, operand 0, single buffered']
    %12 = vsyncpa [#allocation4], 0
    %13 = vsyncpa [#allocation5], 0
    // Predicated region
    $region2: #{tpu_custom_call.1} parent=1 // pred_check
      _
    $region3: #{tpu_custom_call.1} parent=1 // pred_check_branch
      %15 = sbr.rel (0) target = $region5
    $region4: #{tpu_custom_call.1} parent=1 // pred_region
      _
    $region5: #{tpu_custom_call.1} parent=1 // pred_fallthru
      _
    // Predicated region
    $region6: #{tpu_custom_call.1} parent=1 // pred_check
      _
    $region7: #{tpu_custom_call.1} parent=1 // pred_check_branch
      %17 = sbr.rel (0) target = $region9
    $region8: #{tpu_custom_call.1} parent=1 // pred_region
      _
    $region9: #{tpu_custom_call.1} parent=1 // pred_fallthru
      _
    // Predicated region
    $region10: #{tpu_custom_call.1} parent=1 // pred_check
      _
    $region11: #{tpu_custom_call.1} parent=1 // pred_check_branch
      %19 = sbr.rel (0) target = $region13
    $region12: #{tpu_custom_call.1} parent=1 // pred_region
      _
    $region13: #{tpu_custom_call.1} parent=1 // pred_fallthru
      _
    // Predicated region
    $region14: #{tpu_custom_call.1} parent=1 // pred_check
      _
    $region15: #{tpu_custom_call.1} parent=1 // pred_check_branch
      %21 = sbr.rel (0) target = $region17
    $region16: #{tpu_custom_call.1} parent=1 // pred_region
      %s23 = ssub.s32 512, 512
      %24 = vsyncadd [#allocation4], %s23
      %s25 = sshll.u32 [#allocation3], 4
      %s26 = int_to_ptr.vmem [resolvable:$true] %s25
      %31 = dma.hbm_to_vmem [thread:$0]  %s3, 512, %s26, [#allocation4], 128, 128, 8
    $region17: #{tpu_custom_call.1} parent=1 // pred_fallthru
      _
    // Predicated region
    $region18: #{tpu_custom_call.1} parent=1 // pred_check
      _
    $region19: #{tpu_custom_call.1} parent=1 // pred_check_branch
      %33 = sbr.rel (0) target = $region21
    $region20: #{tpu_custom_call.1} parent=1 // pred_region
      _
    $region21: #{tpu_custom_call.1} parent=1 // pred_fallthru
      _
    // Predicated region
    $region22: #{tpu_custom_call.1} parent=1 // pred_check
      _
    $region23: #{tpu_custom_call.1} parent=1 // pred_check_branch
      %35 = sbr.rel (0) target = $region25
    $region24: #{tpu_custom_call.1} parent=1 // pred_region
      _
    $region25: #{tpu_custom_call.1} parent=1 // pred_fallthru
      _
    // Predicated region
    $region26: #{tpu_custom_call.1} parent=1 // pred_check
      _
    $region27: #{tpu_custom_call.1} parent=1 // pred_check_branch
      %37 = sbr.rel (0) target = $region29
    $region28: #{tpu_custom_call.1} parent=1 // pred_region
      _
    $region29: #{tpu_custom_call.1} parent=1 // pred_fallthru
      _
    // Predicated region
    $region30: #{tpu_custom_call.1} parent=1 // pred_check
      _
    $region31: #{tpu_custom_call.1} parent=1 // pred_check_branch
      %39 = sbr.rel (0) target = $region33
    $region32: #{tpu_custom_call.1} parent=1 // pred_region
      %40 = dma.done [#allocation4], 512
    $region33: #{tpu_custom_call.1} parent=1 // pred_fallthru
      _
    %v41 = vld [vmem:[%s0] sm:$0xff]
    %v42 = vld [vmem:[%s0 + $0x8] sm:$0xff]
    %v43 = vld [vmem:[%s1] sm:$0xff]
    %v44 = vld [vmem:[%s1 + $0x8] sm:$0xff]
    %v45 = vld [vmem:[%s1 + $0x10] sm:$0xff]
    %v46 = vld [vmem:[%s1 + $0x18] sm:$0xff]
    %v47 = vld [vmem:[%s2] sm:$0x1]
    %v49 = vlaneseq
    %v50 = vshrl.u32 %v49, 7
    %v51 = vsub.s32 0, %v50
    %v52 = vrot.slane %v47, %v51
    %vm54 = vcmask 261120
    %v56 = vsel %vm54, %v41, 0
    %v59 = vsel %vm54, %v42, 0
    %61 = vmatprep.subr.mxu0 0.0
    %62 = vmatpush1.msra.mxu0 %v43
    %63 = vmatprep.subr.mxu0 0.0
    %64 = vmatpush1.msra.mxu0 %v44
    %65 = vmatprep.subr.mxu0 0.0
    %66 = vmatpush1.msra.mxu0 %v45
    %67 = vmatprep.subr.mxu0 0.0
    %68 = vmatpush1.msra.mxu0 %v46
    %69 = vmatprep.subr.mxu0 0.0
    %70 = vmatpush1.msra.mxu0 0.0
    %71 = vmatprep.subr.mxu0 0.0
    %72 = vmatpush1.msra.mxu0 0.0
    %73 = vmatprep.subr.mxu0 0.0
    %74 = vmatpush1.msra.mxu0 0.0
    %75 = vmatprep.subr.mxu0 0.0
    %76 = vmatpush1.msra.mxu0 0.0
    %77 = vmatprep.subr.mxu0 0.0
    %78 = vmatpush1.msra.mxu0 0.0
    %79 = vmatprep.subr.mxu0 0.0
    %80 = vmatpush1.msra.mxu0 0.0
    %81 = vmatprep.subr.mxu0 0.0
    %82 = vmatpush1.msra.mxu0 0.0
    %83 = vmatprep.subr.mxu0 0.0
    %84 = vmatpush1.msra.mxu0 0.0
    %85 = vmatprep.subr.mxu0 0.0
    %86 = vmatpush1.msra.mxu0 0.0
    %87 = vmatprep.subr.mxu0 0.0
    %88 = vmatpush1.msra.mxu0 0.0
    %89 = vmatprep.subr.mxu0 0.0
    %90 = vmatpush1.msra.mxu0 0.0
    %91 = vmatprep.subr.mxu0 0.0
    %92 = vmatpush1.msra.mxu0 0.0
    %93 = vmatprep.subr.mxu0 0.0
    %94 = vmatpush1.msra.mxu0 0.0
    %95 = vmatprep.subr.mxu0 0.0
    %96 = vmatpush1.msra.mxu0 0.0
    %97 = vmatprep.subr.mxu0 0.0
    %98 = vmatpush1.msra.mxu0 0.0
    %99 = vmatprep.subr.mxu0 0.0
    %100 = vmatpush1.msra.mxu0 0.0
    %101 = vmatprep.subr.mxu0 0.0
    %102 = vmatpush1.msra.mxu0 0.0
    %103 = vmatprep.subr.mxu0 0.0
    %104 = vmatpush1.msra.mxu0 0.0
    %105 = vmatprep.subr.mxu0 0.0
    %106 = vmatpush1.msra.mxu0 0.0
    %107 = vmatprep.subr.mxu0 0.0
    %108 = vmatpush1.msra.mxu0 0.0
    %109 = vmatprep.subr.mxu0 0.0
    %110 = vmatpush1.msra.mxu0 0.0
    %111 = vmatprep.subr.mxu0 0.0
    %112 = vmatpush1.msra.mxu0 0.0
    %113 = vmatprep.subr.mxu0 0.0
    %114 = vmatpush1.msra.mxu0 0.0
    %115 = vmatprep.subr.mxu0 0.0
    %116 = vmatpush1.msra.mxu0 0.0
    %117 = vmatprep.subr.mxu0 0.0
    %118 = vmatpush1.msra.mxu0 0.0
    %119 = vmatprep.subr.mxu0 0.0
    %120 = vmatpush1.msra.mxu0 0.0
    %121 = vmatprep.subr.mxu0 0.0
    %122 = vmatpush1.msra.mxu0 0.0
    %123 = vmatprep.subr.mxu0 0.0
    %124 = vmatpush1.msra.mxu0 0.0
    %125 = vmatprep.mubr.f32.mxu0 0.0
    %126 = vmatmul.mubr.f32.gmra.mrb[0].mxu0 %v56
    %v127 = vpop.f32.mrb[0].mxu0
    %v128 = vadd.f32 %v52, %v127
    %v129 = vpop.f32.mrb[0].mxu0
    %130 = vmatprep.mubr.f32.mxu0 0.0
    %131 = vmatmul.mubr.f32.gmra.mrb[0].mxu0 %v59
    %v132 = vpop.f32.mrb[0].mxu0
    %v133 = vadd.f32 %v52, %v132
    %v134 = vpop.f32.mrb[0].mxu0
    %135 = vdwg.mxu0
    %v136 = vlaneseq
    %v137 = vshrl.u32 %v136, 7
    %v138 = vlaneseq
    %v139 = vand.u32 %v138, 127
    %vm140 = vcmp.ge.s32.totalorder %v137, %v139
    %v141 = vsel %vm140, 1, 0
    %vm142 = vcmp.eq.s32.totalorder %v141, 1
    %144 = vrot.lane.b32.xlu0 %v128, 96
    %v145 = vpop.permute.xlu0 %144
    %vm146 = vcmask 64512
    %v147 = vsel %vm146, %v128, 0
    %v149 = vsel %vm146, %v145, 0
    %151 = vmatprep.subr.mxu0 0.0
    %152 = vmatpush1.xpose.msra.mxu0 %v149
    %153 = vmatprep.subr.mxu0 0.0
    %154 = vmatpush1.xpose.msra.mxu0 0.0
    %155 = vmatprep.subr.mxu0 0.0
    %156 = vmatpush1.xpose.msra.mxu0 0.0
    %157 = vmatprep.subr.mxu0 0.0
    %158 = vmatpush1.xpose.msra.mxu0 0.0
    %159 = vmatprep.subr.mxu0 0.0
    %160 = vmatpush1.xpose.msra.mxu0 0.0
    %161 = vmatprep.subr.mxu0 0.0
    %162 = vmatpush1.xpose.msra.mxu0 0.0
    %163 = vmatprep.subr.mxu0 0.0
    %164 = vmatpush1.xpose.msra.mxu0 0.0
    %165 = vmatprep.subr.mxu0 0.0
    %166 = vmatpush1.xpose.msra.mxu0 0.0
    %167 = vmatprep.subr.mxu0 0.0
    %168 = vmatpush1.xpose.msra.mxu0 0.0
    %169 = vmatprep.subr.mxu0 0.0
    %170 = vmatpush1.xpose.msra.mxu0 0.0
    %171 = vmatprep.subr.mxu0 0.0
    %172 = vmatpush1.xpose.msra.mxu0 0.0
    %173 = vmatprep.subr.mxu0 0.0
    %174 = vmatpush1.xpose.msra.mxu0 0.0
    %175 = vmatprep.subr.mxu0 0.0
    %176 = vmatpush1.xpose.msra.mxu0 0.0
    %177 = vmatprep.subr.mxu0 0.0
    %178 = vmatpush1.xpose.msra.mxu0 0.0
    %179 = vmatprep.subr.mxu0 0.0
    %180 = vmatpush1.xpose.msra.mxu0 0.0
    %181 = vmatprep.subr.mxu0 0.0
    %182 = vmatpush1.xpose.msra.mxu0 0.0
    %183 = vmatprep.subr.mxu0 0.0
    %184 = vmatpush1.xpose.msra.mxu0 0.0
    %185 = vmatprep.subr.mxu0 0.0
    %186 = vmatpush1.xpose.msra.mxu0 0.0
    %187 = vmatprep.subr.mxu0 0.0
    %188 = vmatpush1.xpose.msra.mxu0 0.0
    %189 = vmatprep.subr.mxu0 0.0
    %190 = vmatpush1.xpose.msra.mxu0 0.0
    %191 = vmatprep.subr.mxu0 0.0
    %192 = vmatpush1.xpose.msra.mxu0 0.0
    %193 = vmatprep.subr.mxu0 0.0
    %194 = vmatpush1.xpose.msra.mxu0 0.0
    %195 = vmatprep.subr.mxu0 0.0
    %196 = vmatpush1.xpose.msra.mxu0 0.0
    %197 = vmatprep.subr.mxu0 0.0
    %198 = vmatpush1.xpose.msra.mxu0 0.0
    %199 = vmatprep.subr.mxu0 0.0
    %200 = vmatpush1.xpose.msra.mxu0 0.0
    %201 = vmatprep.subr.mxu0 0.0
    %202 = vmatpush1.xpose.msra.mxu0 0.0
    %203 = vmatprep.subr.mxu0 0.0
    %204 = vmatpush1.xpose.msra.mxu0 0.0
    %205 = vmatprep.subr.mxu0 0.0
    %206 = vmatpush1.xpose.msra.mxu0 0.0
    %207 = vmatprep.subr.mxu0 0.0
    %208 = vmatpush1.xpose.msra.mxu0 0.0
    %209 = vmatprep.subr.mxu0 0.0
    %210 = vmatpush1.xpose.msra.mxu0 0.0
    %211 = vmatprep.subr.mxu0 0.0
    %212 = vmatpush1.xpose.msra.mxu0 0.0
    %213 = vmatprep.subr.mxu0 0.0
    %214 = vmatpush1.xpose.msra.mxu0 0.0
    %215 = vmatprep.mubr.f32.mxu0 0.0
    %216 = vmatmul.mubr.f32.gmra.mrb[0].mxu0 %v147
    %v217 = vpop.f32.mrb[0].mxu0
    %v218 = vadd.f32 0.0, %v217
    %v219 = vpop.f32.mrb[0].mxu0
    %220 = vdwg.mxu0
    %222 = vrot.lane.b32.xlu0 %v133, 96
    %v223 = vpop.permute.xlu0 %222
    %v224 = vsel %vm146, %v133, 0
    %v226 = vsel %vm146, %v223, 0
    %228 = vmatprep.subr.mxu0 0.0
    %229 = vmatpush1.xpose.msra.mxu0 %v226
    %230 = vmatprep.subr.mxu0 0.0
    %231 = vmatpush1.xpose.msra.mxu0 0.0
    %232 = vmatprep.subr.mxu0 0.0
    %233 = vmatpush1.xpose.msra.mxu0 0.0
    %234 = vmatprep.subr.mxu0 0.0
    %235 = vmatpush1.xpose.msra.mxu0 0.0
    %236 = vmatprep.subr.mxu0 0.0
    %237 = vmatpush1.xpose.msra.mxu0 0.0
    %238 = vmatprep.subr.mxu0 0.0
    %239 = vmatpush1.xpose.msra.mxu0 0.0
    %240 = vmatprep.subr.mxu0 0.0
    %241 = vmatpush1.xpose.msra.mxu0 0.0
    %242 = vmatprep.subr.mxu0 0.0
    %243 = vmatpush1.xpose.msra.mxu0 0.0
    %244 = vmatprep.subr.mxu0 0.0
    %245 = vmatpush1.xpose.msra.mxu0 0.0
    %246 = vmatprep.subr.mxu0 0.0
    %247 = vmatpush1.xpose.msra.mxu0 0.0
    %248 = vmatprep.subr.mxu0 0.0
    %249 = vmatpush1.xpose.msra.mxu0 0.0
    %250 = vmatprep.subr.mxu0 0.0
    %251 = vmatpush1.xpose.msra.mxu0 0.0
    %252 = vmatprep.subr.mxu0 0.0
    %253 = vmatpush1.xpose.msra.mxu0 0.0
    %254 = vmatprep.subr.mxu0 0.0
    %255 = vmatpush1.xpose.msra.mxu0 0.0
    %256 = vmatprep.subr.mxu0 0.0
    %257 = vmatpush1.xpose.msra.mxu0 0.0
    %258 = vmatprep.subr.mxu0 0.0
    %259 = vmatpush1.xpose.msra.mxu0 0.0
    %260 = vmatprep.subr.mxu0 0.0
    %261 = vmatpush1.xpose.msra.mxu0 0.0
    %262 = vmatprep.subr.mxu0 0.0
    %263 = vmatpush1.xpose.msra.mxu0 0.0
    %264 = vmatprep.subr.mxu0 0.0
    %265 = vmatpush1.xpose.msra.mxu0 0.0
    %266 = vmatprep.subr.mxu0 0.0
    %267 = vmatpush1.xpose.msra.mxu0 0.0
    %268 = vmatprep.subr.mxu0 0.0
    %269 = vmatpush1.xpose.msra.mxu0 0.0
    %270 = vmatprep.subr.mxu0 0.0
    %271 = vmatpush1.xpose.msra.mxu0 0.0
    %272 = vmatprep.subr.mxu0 0.0
    %273 = vmatpush1.xpose.msra.mxu0 0.0
    %274 = vmatprep.subr.mxu0 0.0
    %275 = vmatpush1.xpose.msra.mxu0 0.0
    %276 = vmatprep.subr.mxu0 0.0
    %277 = vmatpush1.xpose.msra.mxu0 0.0
    %278 = vmatprep.subr.mxu0 0.0
    %279 = vmatpush1.xpose.msra.mxu0 0.0
    %280 = vmatprep.subr.mxu0 0.0
    %281 = vmatpush1.xpose.msra.mxu0 0.0
    %282 = vmatprep.subr.mxu0 0.0
    %283 = vmatpush1.xpose.msra.mxu0 0.0
    %284 = vmatprep.subr.mxu0 0.0
    %285 = vmatpush1.xpose.msra.mxu0 0.0
    %286 = vmatprep.subr.mxu0 0.0
    %287 = vmatpush1.xpose.msra.mxu0 0.0
    %288 = vmatprep.subr.mxu0 0.0
    %289 = vmatpush1.xpose.msra.mxu0 0.0
    %290 = vmatprep.subr.mxu0 0.0
    %291 = vmatpush1.xpose.msra.mxu0 0.0
    %292 = vmatprep.mubr.f32.mxu0 0.0
    %293 = vmatmul.mubr.f32.gmra.mrb[0].mxu0 %v224
    %v294 = vpop.f32.mrb[0].mxu0
    %v295 = vadd.f32 0.0, %v294
    %v296 = vpop.f32.mrb[0].mxu0
    %297 = vdwg.mxu0
    %v298 = vsel %vm142, %v218, -1e+30
    %v299 = vsel %vm142, %v295, -1e+30
    %v300 = vsel %vm146, %v298, -inf
    %301 = vmax.xlane.f32.xlu0 %v300
    %v302 = vpop.xlane.xlu0 %301
    %v303 = vsel %vm146, %v299, -inf
    %304 = vmax.xlane.f32.xlu0 %v303
    %v305 = vpop.xlane.xlu0 %304
    %v306 = vsub.f32 %v298, %v302
    %v307 = vsub.f32 %v299, %v305
    %v308 = vmul.f32 %v306, 1.442695
    %v309 = vpow.pop %v308
    %v310 = vmul.f32 %v307, 1.442695
    %v311 = vpow.pop %v310
    %v312 = vsel %vm146, %v309, 0.0
    %313 = vadd.xlane.f32.xlu0 %v312
    %v314 = vpop.xlane.xlu0 %313
    %v315 = vsel %vm146, %v311, 0.0
    %316 = vadd.xlane.f32.xlu0 %v315
    %v317 = vpop.xlane.xlu0 %316
    %v318 = vrcp.pop %v314
    %v319 = vrcp.pop %v317
    %v320 = vmul.f32 %v309, %v318
    %v321 = vmul.f32 %v311, %v319
    %322 = vrot.lane.b32.xlu0 %v128, 64
    %v323 = vpop.permute.xlu0 %322
    %v326 = vsel %vm146, %v320, 0
    %328 = vmatprep.subr.mxu0 0.0
    %329 = vmatpush1.msra.mxu0 %v323
    %330 = vmatprep.subr.mxu0 0.0
    %331 = vmatpush1.msra.mxu0 0.0
    %332 = vmatprep.subr.mxu0 0.0
    %333 = vmatpush1.msra.mxu0 0.0
    %334 = vmatprep.subr.mxu0 0.0
    %335 = vmatpush1.msra.mxu0 0.0
    %336 = vmatprep.subr.mxu0 0.0
    %337 = vmatpush1.msra.mxu0 0.0
    %338 = vmatprep.subr.mxu0 0.0
    %339 = vmatpush1.msra.mxu0 0.0
    %340 = vmatprep.subr.mxu0 0.0
    %341 = vmatpush1.msra.mxu0 0.0
    %342 = vmatprep.subr.mxu0 0.0
    %343 = vmatpush1.msra.mxu0 0.0
    %344 = vmatprep.subr.mxu0 0.0
    %345 = vmatpush1.msra.mxu0 0.0
    %346 = vmatprep.subr.mxu0 0.0
    %347 = vmatpush1.msra.mxu0 0.0
    %348 = vmatprep.subr.mxu0 0.0
    %349 = vmatpush1.msra.mxu0 0.0
    %350 = vmatprep.subr.mxu0 0.0
    %351 = vmatpush1.msra.mxu0 0.0
    %352 = vmatprep.subr.mxu0 0.0
    %353 = vmatpush1.msra.mxu0 0.0
    %354 = vmatprep.subr.mxu0 0.0
    %355 = vmatpush1.msra.mxu0 0.0
    %356 = vmatprep.subr.mxu0 0.0
    %357 = vmatpush1.msra.mxu0 0.0
    %358 = vmatprep.subr.mxu0 0.0
    %359 = vmatpush1.msra.mxu0 0.0
    %360 = vmatprep.subr.mxu0 0.0
    %361 = vmatpush1.msra.mxu0 0.0
    %362 = vmatprep.subr.mxu0 0.0
    %363 = vmatpush1.msra.mxu0 0.0
    %364 = vmatprep.subr.mxu0 0.0
    %365 = vmatpush1.msra.mxu0 0.0
    %366 = vmatprep.subr.mxu0 0.0
    %367 = vmatpush1.msra.mxu0 0.0
    %368 = vmatprep.subr.mxu0 0.0
    %369 = vmatpush1.msra.mxu0 0.0
    %370 = vmatprep.subr.mxu0 0.0
    %371 = vmatpush1.msra.mxu0 0.0
    %372 = vmatprep.subr.mxu0 0.0
    %373 = vmatpush1.msra.mxu0 0.0
    %374 = vmatprep.subr.mxu0 0.0
    %375 = vmatpush1.msra.mxu0 0.0
    %376 = vmatprep.subr.mxu0 0.0
    %377 = vmatpush1.msra.mxu0 0.0
    %378 = vmatprep.subr.mxu0 0.0
    %379 = vmatpush1.msra.mxu0 0.0
    %380 = vmatprep.subr.mxu0 0.0
    %381 = vmatpush1.msra.mxu0 0.0
    %382 = vmatprep.subr.mxu0 0.0
    %383 = vmatpush1.msra.mxu0 0.0
    %384 = vmatprep.subr.mxu0 0.0
    %385 = vmatpush1.msra.mxu0 0.0
    %386 = vmatprep.subr.mxu0 0.0
    %387 = vmatpush1.msra.mxu0 0.0
    %388 = vmatprep.subr.mxu0 0.0
    %389 = vmatpush1.msra.mxu0 0.0
    %390 = vmatprep.subr.mxu0 0.0
    %391 = vmatpush1.msra.mxu0 0.0
    %392 = vmatprep.mubr.f32.mxu0 0.0
    %393 = vmatmul.mubr.f32.gmra.mrb[0].mxu0 %v326
    %v394 = vpop.f32.mrb[0].mxu0
    %v395 = vadd.f32 0.0, %v394
    %v396 = vpop.f32.mrb[0].mxu0
    %397 = vdwg.mxu0
    %398 = vrot.lane.b32.xlu0 %v133, 64
    %v399 = vpop.permute.xlu0 %398
    %v402 = vsel %vm146, %v321, 0
    %404 = vmatprep.subr.mxu0 0.0
    %405 = vmatpush1.msra.mxu0 %v399
    %406 = vmatprep.subr.mxu0 0.0
    %407 = vmatpush1.msra.mxu0 0.0
    %408 = vmatprep.subr.mxu0 0.0
    %409 = vmatpush1.msra.mxu0 0.0
    %410 = vmatprep.subr.mxu0 0.0
    %411 = vmatpush1.msra.mxu0 0.0
    %412 = vmatprep.subr.mxu0 0.0
    %413 = vmatpush1.msra.mxu0 0.0
    %414 = vmatprep.subr.mxu0 0.0
    %415 = vmatpush1.msra.mxu0 0.0
    %416 = vmatprep.subr.mxu0 0.0
    %417 = vmatpush1.msra.mxu0 0.0
    %418 = vmatprep.subr.mxu0 0.0
    %419 = vmatpush1.msra.mxu0 0.0
    %420 = vmatprep.subr.mxu0 0.0
    %421 = vmatpush1.msra.mxu0 0.0
    %422 = vmatprep.subr.mxu0 0.0
    %423 = vmatpush1.msra.mxu0 0.0
    %424 = vmatprep.subr.mxu0 0.0
    %425 = vmatpush1.msra.mxu0 0.0
    %426 = vmatprep.subr.mxu0 0.0
    %427 = vmatpush1.msra.mxu0 0.0
    %428 = vmatprep.subr.mxu0 0.0
    %429 = vmatpush1.msra.mxu0 0.0
    %430 = vmatprep.subr.mxu0 0.0
    %431 = vmatpush1.msra.mxu0 0.0
    %432 = vmatprep.subr.mxu0 0.0
    %433 = vmatpush1.msra.mxu0 0.0
    %434 = vmatprep.subr.mxu0 0.0
    %435 = vmatpush1.msra.mxu0 0.0
    %436 = vmatprep.subr.mxu0 0.0
    %437 = vmatpush1.msra.mxu0 0.0
    %438 = vmatprep.subr.mxu0 0.0
    %439 = vmatpush1.msra.mxu0 0.0
    %440 = vmatprep.subr.mxu0 0.0
    %441 = vmatpush1.msra.mxu0 0.0
    %442 = vmatprep.subr.mxu0 0.0
    %443 = vmatpush1.msra.mxu0 0.0
    %444 = vmatprep.subr.mxu0 0.0
    %445 = vmatpush1.msra.mxu0 0.0
    %446 = vmatprep.subr.mxu0 0.0
    %447 = vmatpush1.msra.mxu0 0.0
    %448 = vmatprep.subr.mxu0 0.0
    %449 = vmatpush1.msra.mxu0 0.0
    %450 = vmatprep.subr.mxu0 0.0
    %451 = vmatpush1.msra.mxu0 0.0
    %452 = vmatprep.subr.mxu0 0.0
    %453 = vmatpush1.msra.mxu0 0.0
    %454 = vmatprep.subr.mxu0 0.0
    %455 = vmatpush1.msra.mxu0 0.0
    %456 = vmatprep.subr.mxu0 0.0
    %457 = vmatpush1.msra.mxu0 0.0
    %458 = vmatprep.subr.mxu0 0.0
    %459 = vmatpush1.msra.mxu0 0.0
    %460 = vmatprep.subr.mxu0 0.0
    %461 = vmatpush1.msra.mxu0 0.0
    %462 = vmatprep.subr.mxu0 0.0
    %463 = vmatpush1.msra.mxu0 0.0
    %464 = vmatprep.subr.mxu0 0.0
    %465 = vmatpush1.msra.mxu0 0.0
    %466 = vmatprep.subr.mxu0 0.0
    %467 = vmatpush1.msra.mxu0 0.0
    %468 = vmatprep.mubr.f32.mxu0 0.0
    %469 = vmatmul.mubr.f32.gmra.mrb[0].mxu0 %v402
    %v470 = vpop.f32.mrb[0].mxu0
    %v471 = vadd.f32 0.0, %v470
    %v472 = vpop.f32.mrb[0].mxu0
    %473 = vdwg.mxu0
    %474 = vst.msk [vmem:[#allocation2] sm:$0xff] %vm146, %v395
    %475 = vst.msk [vmem:[#allocation2 + $0x8] sm:$0xff] %vm146, %v471
    %476 = vrot.lane.b32.xlu0 %v128, 120
    %v477 = vpop.permute.xlu0 %476
    %478 = vrot.lane.b32.xlu0 %v128, 88
    %v479 = vpop.permute.xlu0 %478
    %v480 = vsel %vm146, %v477, 0
    %v482 = vsel %vm146, %v479, 0
    %484 = vmatprep.subr.mxu0 0.0
    %485 = vmatpush1.xpose.msra.mxu0 %v482
    %486 = vmatprep.subr.mxu0 0.0
    %487 = vmatpush1.xpose.msra.mxu0 0.0
    %488 = vmatprep.subr.mxu0 0.0
    %489 = vmatpush1.xpose.msra.mxu0 0.0
    %490 = vmatprep.subr.mxu0 0.0
    %491 = vmatpush1.xpose.msra.mxu0 0.0
    %492 = vmatprep.subr.mxu0 0.0
    %493 = vmatpush1.xpose.msra.mxu0 0.0
    %494 = vmatprep.subr.mxu0 0.0
    %495 = vmatpush1.xpose.msra.mxu0 0.0
    %496 = vmatprep.subr.mxu0 0.0
    %497 = vmatpush1.xpose.msra.mxu0 0.0
    %498 = vmatprep.subr.mxu0 0.0
    %499 = vmatpush1.xpose.msra.mxu0 0.0
    %500 = vmatprep.subr.mxu0 0.0
    %501 = vmatpush1.xpose.msra.mxu0 0.0
    %502 = vmatprep.subr.mxu0 0.0
    %503 = vmatpush1.xpose.msra.mxu0 0.0
    %504 = vmatprep.subr.mxu0 0.0
    %505 = vmatpush1.xpose.msra.mxu0 0.0
    %506 = vmatprep.subr.mxu0 0.0
    %507 = vmatpush1.xpose.msra.mxu0 0.0
    %508 = vmatprep.subr.mxu0 0.0
    %509 = vmatpush1.xpose.msra.mxu0 0.0
    %510 = vmatprep.subr.mxu0 0.0
    %511 = vmatpush1.xpose.msra.mxu0 0.0
    %512 = vmatprep.subr.mxu0 0.0
    %513 = vmatpush1.xpose.msra.mxu0 0.0
    %514 = vmatprep.subr.mxu0 0.0
    %515 = vmatpush1.xpose.msra.mxu0 0.0
    %516 = vmatprep.subr.mxu0 0.0
    %517 = vmatpush1.xpose.msra.mxu0 0.0
    %518 = vmatprep.subr.mxu0 0.0
    %519 = vmatpush1.xpose.msra.mxu0 0.0
    %520 = vmatprep.subr.mxu0 0.0
    %521 = vmatpush1.xpose.msra.mxu0 0.0
    %522 = vmatprep.subr.mxu0 0.0
    %523 = vmatpush1.xpose.msra.mxu0 0.0
    %524 = vmatprep.subr.mxu0 0.0
    %525 = vmatpush1.xpose.msra.mxu0 0.0
    %526 = vmatprep.subr.mxu0 0.0
    %527 = vmatpush1.xpose.msra.mxu0 0.0
    %528 = vmatprep.subr.mxu0 0.0
    %529 = vmatpush1.xpose.msra.mxu0 0.0
    %530 = vmatprep.subr.mxu0 0.0
    %531 = vmatpush1.xpose.msra.mxu0 0.0
    %532 = vmatprep.subr.mxu0 0.0
    %533 = vmatpush1.xpose.msra.mxu0 0.0
    %534 = vmatprep.subr.mxu0 0.0
    %535 = vmatpush1.xpose.msra.mxu0 0.0
    %536 = vmatprep.subr.mxu0 0.0
    %537 = vmatpush1.xpose.msra.mxu0 0.0
    %538 = vmatprep.subr.mxu0 0.0
    %539 = vmatpush1.xpose.msra.mxu0 0.0
    %540 = vmatprep.subr.mxu0 0.0
    %541 = vmatpush1.xpose.msra.mxu0 0.0
    %542 = vmatprep.subr.mxu0 0.0
    %543 = vmatpush1.xpose.msra.mxu0 0.0
    %544 = vmatprep.subr.mxu0 0.0
    %545 = vmatpush1.xpose.msra.mxu0 0.0
    %546 = vmatprep.subr.mxu0 0.0
    %547 = vmatpush1.xpose.msra.mxu0 0.0
    %548 = vmatprep.mubr.f32.mxu0 0.0
    %549 = vmatmul.mubr.f32.gmra.mrb[0].mxu0 %v480
    %v550 = vpop.f32.mrb[0].mxu0
    %v551 = vadd.f32 0.0, %v550
    %v552 = vpop.f32.mrb[0].mxu0
    %553 = vdwg.mxu0
    %554 = vrot.lane.b32.xlu0 %v133, 120
    %v555 = vpop.permute.xlu0 %554
    %556 = vrot.lane.b32.xlu0 %v133, 88
    %v557 = vpop.permute.xlu0 %556
    %v558 = vsel %vm146, %v555, 0
    %v560 = vsel %vm146, %v557, 0
    %562 = vmatprep.subr.mxu0 0.0
    %563 = vmatpush1.xpose.msra.mxu0 %v560
    %564 = vmatprep.subr.mxu0 0.0
    %565 = vmatpush1.xpose.msra.mxu0 0.0
    %566 = vmatprep.subr.mxu0 0.0
    %567 = vmatpush1.xpose.msra.mxu0 0.0
    %568 = vmatprep.subr.mxu0 0.0
    %569 = vmatpush1.xpose.msra.mxu0 0.0
    %570 = vmatprep.subr.mxu0 0.0
    %571 = vmatpush1.xpose.msra.mxu0 0.0
    %572 = vmatprep.subr.mxu0 0.0
    %573 = vmatpush1.xpose.msra.mxu0 0.0
    %574 = vmatprep.subr.mxu0 0.0
    %575 = vmatpush1.xpose.msra.mxu0 0.0
    %576 = vmatprep.subr.mxu0 0.0
    %577 = vmatpush1.xpose.msra.mxu0 0.0
    %578 = vmatprep.subr.mxu0 0.0
    %579 = vmatpush1.xpose.msra.mxu0 0.0
    %580 = vmatprep.subr.mxu0 0.0
    %581 = vmatpush1.xpose.msra.mxu0 0.0
    %582 = vmatprep.subr.mxu0 0.0
    %583 = vmatpush1.xpose.msra.mxu0 0.0
    %584 = vmatprep.subr.mxu0 0.0
    %585 = vmatpush1.xpose.msra.mxu0 0.0
    %586 = vmatprep.subr.mxu0 0.0
    %587 = vmatpush1.xpose.msra.mxu0 0.0
    %588 = vmatprep.subr.mxu0 0.0
    %589 = vmatpush1.xpose.msra.mxu0 0.0
    %590 = vmatprep.subr.mxu0 0.0
    %591 = vmatpush1.xpose.msra.mxu0 0.0
    %592 = vmatprep.subr.mxu0 0.0
    %593 = vmatpush1.xpose.msra.mxu0 0.0
    %594 = vmatprep.subr.mxu0 0.0
    %595 = vmatpush1.xpose.msra.mxu0 0.0
    %596 = vmatprep.subr.mxu0 0.0
    %597 = vmatpush1.xpose.msra.mxu0 0.0
    %598 = vmatprep.subr.mxu0 0.0
    %599 = vmatpush1.xpose.msra.mxu0 0.0
    %600 = vmatprep.subr.mxu0 0.0
    %601 = vmatpush1.xpose.msra.mxu0 0.0
    %602 = vmatprep.subr.mxu0 0.0
    %603 = vmatpush1.xpose.msra.mxu0 0.0
    %604 = vmatprep.subr.mxu0 0.0
    %605 = vmatpush1.xpose.msra.mxu0 0.0
    %606 = vmatprep.subr.mxu0 0.0
    %607 = vmatpush1.xpose.msra.mxu0 0.0
    %608 = vmatprep.subr.mxu0 0.0
    %609 = vmatpush1.xpose.msra.mxu0 0.0
    %610 = vmatprep.subr.mxu0 0.0
    %611 = vmatpush1.xpose.msra.mxu0 0.0
    %612 = vmatprep.subr.mxu0 0.0
    %613 = vmatpush1.xpose.msra.mxu0 0.0
    %614 = vmatprep.subr.mxu0 0.0
    %615 = vmatpush1.xpose.msra.mxu0 0.0
    %616 = vmatprep.subr.mxu0 0.0
    %617 = vmatpush1.xpose.msra.mxu0 0.0
    %618 = vmatprep.subr.mxu0 0.0
    %619 = vmatpush1.xpose.msra.mxu0 0.0
    %620 = vmatprep.subr.mxu0 0.0
    %621 = vmatpush1.xpose.msra.mxu0 0.0
    %622 = vmatprep.subr.mxu0 0.0
    %623 = vmatpush1.xpose.msra.mxu0 0.0
    %624 = vmatprep.subr.mxu0 0.0
    %625 = vmatpush1.xpose.msra.mxu0 0.0
    %626 = vmatprep.mubr.f32.mxu0 0.0
    %627 = vmatmul.mubr.f32.gmra.mrb[0].mxu0 %v558
    %v628 = vpop.f32.mrb[0].mxu0
    %v629 = vadd.f32 0.0, %v628
    %v630 = vpop.f32.mrb[0].mxu0
    %631 = vdwg.mxu0
    %v632 = vsel %vm142, %v551, -1e+30
    %v633 = vsel %vm142, %v629, -1e+30
    %v634 = vsel %vm146, %v632, -inf
    %635 = vmax.xlane.f32.xlu0 %v634
    %v636 = vpop.xlane.xlu0 %635
    %v637 = vsel %vm146, %v633, -inf
    %638 = vmax.xlane.f32.xlu0 %v637
    %v639 = vpop.xlane.xlu0 %638
    %v640 = vsub.f32 %v632, %v636
    %v641 = vsub.f32 %v633, %v639
    %v642 = vmul.f32 %v640, 1.442695
    %v643 = vpow.pop %v642
    %v644 = vmul.f32 %v641, 1.442695
    %v645 = vpow.pop %v644
    %v646 = vsel %vm146, %v643, 0.0
    %647 = vadd.xlane.f32.xlu0 %v646
    %v648 = vpop.xlane.xlu0 %647
    %v649 = vsel %vm146, %v645, 0.0
    %650 = vadd.xlane.f32.xlu0 %v649
    %v651 = vpop.xlane.xlu0 %650
    %v652 = vrcp.pop %v648
    %v653 = vrcp.pop %v651
    %v654 = vmul.f32 %v643, %v652
    %v655 = vmul.f32 %v645, %v653
    %656 = vrot.lane.b32.xlu0 %v128, 56
    %v657 = vpop.permute.xlu0 %656
    %v660 = vsel %vm146, %v654, 0
    %662 = vmatprep.subr.mxu0 0.0
    %663 = vmatpush1.msra.mxu0 %v657
    %664 = vmatprep.subr.mxu0 0.0
    %665 = vmatpush1.msra.mxu0 0.0
    %666 = vmatprep.subr.mxu0 0.0
    %667 = vmatpush1.msra.mxu0 0.0
    %668 = vmatprep.subr.mxu0 0.0
    %669 = vmatpush1.msra.mxu0 0.0
    %670 = vmatprep.subr.mxu0 0.0
    %671 = vmatpush1.msra.mxu0 0.0
    %672 = vmatprep.subr.mxu0 0.0
    %673 = vmatpush1.msra.mxu0 0.0
    %674 = vmatprep.subr.mxu0 0.0
    %675 = vmatpush1.msra.mxu0 0.0
    %676 = vmatprep.subr.mxu0 0.0
    %677 = vmatpush1.msra.mxu0 0.0
    %678 = vmatprep.subr.mxu0 0.0
    %679 = vmatpush1.msra.mxu0 0.0
    %680 = vmatprep.subr.mxu0 0.0
    %681 = vmatpush1.msra.mxu0 0.0
    %682 = vmatprep.subr.mxu0 0.0
    %683 = vmatpush1.msra.mxu0 0.0
    %684 = vmatprep.subr.mxu0 0.0
    %685 = vmatpush1.msra.mxu0 0.0
    %686 = vmatprep.subr.mxu0 0.0
    %687 = vmatpush1.msra.mxu0 0.0
    %688 = vmatprep.subr.mxu0 0.0
    %689 = vmatpush1.msra.mxu0 0.0
    %690 = vmatprep.subr.mxu0 0.0
    %691 = vmatpush1.msra.mxu0 0.0
    %692 = vmatprep.subr.mxu0 0.0
    %693 = vmatpush1.msra.mxu0 0.0
    %694 = vmatprep.subr.mxu0 0.0
    %695 = vmatpush1.msra.mxu0 0.0
    %696 = vmatprep.subr.mxu0 0.0
    %697 = vmatpush1.msra.mxu0 0.0
    %698 = vmatprep.subr.mxu0 0.0
    %699 = vmatpush1.msra.mxu0 0.0
    %700 = vmatprep.subr.mxu0 0.0
    %701 = vmatpush1.msra.mxu0 0.0
    %702 = vmatprep.subr.mxu0 0.0
    %703 = vmatpush1.msra.mxu0 0.0
    %704 = vmatprep.subr.mxu0 0.0
    %705 = vmatpush1.msra.mxu0 0.0
    %706 = vmatprep.subr.mxu0 0.0
    %707 = vmatpush1.msra.mxu0 0.0
    %708 = vmatprep.subr.mxu0 0.0
    %709 = vmatpush1.msra.mxu0 0.0
    %710 = vmatprep.subr.mxu0 0.0
    %711 = vmatpush1.msra.mxu0 0.0
    %712 = vmatprep.subr.mxu0 0.0
    %713 = vmatpush1.msra.mxu0 0.0
    %714 = vmatprep.subr.mxu0 0.0
    %715 = vmatpush1.msra.mxu0 0.0
    %716 = vmatprep.subr.mxu0 0.0
    %717 = vmatpush1.msra.mxu0 0.0
    %718 = vmatprep.subr.mxu0 0.0
    %719 = vmatpush1.msra.mxu0 0.0
    %720 = vmatprep.subr.mxu0 0.0
    %721 = vmatpush1.msra.mxu0 0.0
    %722 = vmatprep.subr.mxu0 0.0
    %723 = vmatpush1.msra.mxu0 0.0
    %724 = vmatprep.subr.mxu0 0.0
    %725 = vmatpush1.msra.mxu0 0.0
    %726 = vmatprep.mubr.f32.mxu0 0.0
    %727 = vmatmul.mubr.f32.gmra.mrb[0].mxu0 %v660
    %v728 = vpop.f32.mrb[0].mxu0
    %v729 = vadd.f32 0.0, %v728
    %v730 = vpop.f32.mrb[0].mxu0
    %731 = vdwg.mxu0
    %732 = vrot.lane.b32.xlu0 %v133, 56
    %v733 = vpop.permute.xlu0 %732
    %v736 = vsel %vm146, %v655, 0
    %738 = vmatprep.subr.mxu0 0.0
    %739 = vmatpush1.msra.mxu0 %v733
    %740 = vmatprep.subr.mxu0 0.0
    %741 = vmatpush1.msra.mxu0 0.0
    %742 = vmatprep.subr.mxu0 0.0
    %743 = vmatpush1.msra.mxu0 0.0
    %744 = vmatprep.subr.mxu0 0.0
    %745 = vmatpush1.msra.mxu0 0.0
    %746 = vmatprep.subr.mxu0 0.0
    %747 = vmatpush1.msra.mxu0 0.0
    %748 = vmatprep.subr.mxu0 0.0
    %749 = vmatpush1.msra.mxu0 0.0
    %750 = vmatprep.subr.mxu0 0.0
    %751 = vmatpush1.msra.mxu0 0.0
    %752 = vmatprep.subr.mxu0 0.0
    %753 = vmatpush1.msra.mxu0 0.0
    %754 = vmatprep.subr.mxu0 0.0
    %755 = vmatpush1.msra.mxu0 0.0
    %756 = vmatprep.subr.mxu0 0.0
    %757 = vmatpush1.msra.mxu0 0.0
    %758 = vmatprep.subr.mxu0 0.0
    %759 = vmatpush1.msra.mxu0 0.0
    %760 = vmatprep.subr.mxu0 0.0
    %761 = vmatpush1.msra.mxu0 0.0
    %762 = vmatprep.subr.mxu0 0.0
    %763 = vmatpush1.msra.mxu0 0.0
    %764 = vmatprep.subr.mxu0 0.0
    %765 = vmatpush1.msra.mxu0 0.0
    %766 = vmatprep.subr.mxu0 0.0
    %767 = vmatpush1.msra.mxu0 0.0
    %768 = vmatprep.subr.mxu0 0.0
    %769 = vmatpush1.msra.mxu0 0.0
    %770 = vmatprep.subr.mxu0 0.0
    %771 = vmatpush1.msra.mxu0 0.0
    %772 = vmatprep.subr.mxu0 0.0
    %773 = vmatpush1.msra.mxu0 0.0
    %774 = vmatprep.subr.mxu0 0.0
    %775 = vmatpush1.msra.mxu0 0.0
    %776 = vmatprep.subr.mxu0 0.0
    %777 = vmatpush1.msra.mxu0 0.0
    %778 = vmatprep.subr.mxu0 0.0
    %779 = vmatpush1.msra.mxu0 0.0
    %780 = vmatprep.subr.mxu0 0.0
    %781 = vmatpush1.msra.mxu0 0.0
    %782 = vmatprep.subr.mxu0 0.0
    %783 = vmatpush1.msra.mxu0 0.0
    %784 = vmatprep.subr.mxu0 0.0
    %785 = vmatpush1.msra.mxu0 0.0
    %786 = vmatprep.subr.mxu0 0.0
    %787 = vmatpush1.msra.mxu0 0.0
    %788 = vmatprep.subr.mxu0 0.0
    %789 = vmatpush1.msra.mxu0 0.0
    %790 = vmatprep.subr.mxu0 0.0
    %791 = vmatpush1.msra.mxu0 0.0
    %792 = vmatprep.subr.mxu0 0.0
    %793 = vmatpush1.msra.mxu0 0.0
    %794 = vmatprep.subr.mxu0 0.0
    %795 = vmatpush1.msra.mxu0 0.0
    %796 = vmatprep.subr.mxu0 0.0
    %797 = vmatpush1.msra.mxu0 0.0
    %798 = vmatprep.subr.mxu0 0.0
    %799 = vmatpush1.msra.mxu0 0.0
    %800 = vmatprep.subr.mxu0 0.0
    %801 = vmatpush1.msra.mxu0 0.0
    %802 = vmatprep.mubr.f32.mxu0 0.0
    %803 = vmatmul.mubr.f32.gmra.mrb[0].mxu0 %v736
    %v804 = vpop.f32.mrb[0].mxu0
    %v805 = vadd.f32 0.0, %v804
    %v806 = vpop.f32.mrb[0].mxu0
    %807 = vdwg.mxu0
    %810 = vrot.lane.b32.xlu0 %v729, 8
    %v811 = vpop.permute.xlu0 %810
    %812 = vrot.lane.b32.xlu0 %v805, 8
    %v813 = vpop.permute.xlu0 %812
    %vm816 = vcmask 130112
    %817 = vst.msk [vmem:[#allocation2] sm:$0xff] %vm816, %v811
    %818 = vst.msk [vmem:[#allocation2 + $0x8] sm:$0xff] %vm816, %v813
    %819 = vrot.lane.b32.xlu0 %v128, 112
    %v820 = vpop.permute.xlu0 %819
    %821 = vrot.lane.b32.xlu0 %v128, 80
    %v822 = vpop.permute.xlu0 %821
    %v823 = vsel %vm146, %v820, 0
    %v825 = vsel %vm146, %v822, 0
    %827 = vmatprep.subr.mxu0 0.0
    %828 = vmatpush1.xpose.msra.mxu0 %v825
    %829 = vmatprep.subr.mxu0 0.0
    %830 = vmatpush1.xpose.msra.mxu0 0.0
    %831 = vmatprep.subr.mxu0 0.0
    %832 = vmatpush1.xpose.msra.mxu0 0.0
    %833 = vmatprep.subr.mxu0 0.0
    %834 = vmatpush1.xpose.msra.mxu0 0.0
    %835 = vmatprep.subr.mxu0 0.0
    %836 = vmatpush1.xpose.msra.mxu0 0.0
    %837 = vmatprep.subr.mxu0 0.0
    %838 = vmatpush1.xpose.msra.mxu0 0.0
    %839 = vmatprep.subr.mxu0 0.0
    %840 = vmatpush1.xpose.msra.mxu0 0.0
    %841 = vmatprep.subr.mxu0 0.0
    %842 = vmatpush1.xpose.msra.mxu0 0.0
    %843 = vmatprep.subr.mxu0 0.0
    %844 = vmatpush1.xpose.msra.mxu0 0.0
    %845 = vmatprep.subr.mxu0 0.0
    %846 = vmatpush1.xpose.msra.mxu0 0.0
    %847 = vmatprep.subr.mxu0 0.0
    %848 = vmatpush1.xpose.msra.mxu0 0.0
    %849 = vmatprep.subr.mxu0 0.0
    %850 = vmatpush1.xpose.msra.mxu0 0.0
    %851 = vmatprep.subr.mxu0 0.0
    %852 = vmatpush1.xpose.msra.mxu0 0.0
    %853 = vmatprep.subr.mxu0 0.0
    %854 = vmatpush1.xpose.msra.mxu0 0.0
    %855 = vmatprep.subr.mxu0 0.0
    %856 = vmatpush1.xpose.msra.mxu0 0.0
    %857 = vmatprep.subr.mxu0 0.0
    %858 = vmatpush1.xpose.msra.mxu0 0.0
    %859 = vmatprep.subr.mxu0 0.0
    %860 = vmatpush1.xpose.msra.mxu0 0.0
    %861 = vmatprep.subr.mxu0 0.0
    %862 = vmatpush1.xpose.msra.mxu0 0.0
    %863 = vmatprep.subr.mxu0 0.0
    %864 = vmatpush1.xpose.msra.mxu0 0.0
    %865 = vmatprep.subr.mxu0 0.0
    %866 = vmatpush1.xpose.msra.mxu0 0.0
    %867 = vmatprep.subr.mxu0 0.0
    %868 = vmatpush1.xpose.msra.mxu0 0.0
    %869 = vmatprep.subr.mxu0 0.0
    %870 = vmatpush1.xpose.msra.mxu0 0.0
    %871 = vmatprep.subr.mxu0 0.0
    %872 = vmatpush1.xpose.msra.mxu0 0.0
    %873 = vmatprep.subr.mxu0 0.0
    %874 = vmatpush1.xpose.msra.mxu0 0.0
    %875 = vmatprep.subr.mxu0 0.0
    %876 = vmatpush1.xpose.msra.mxu0 0.0
    %877 = vmatprep.subr.mxu0 0.0
    %878 = vmatpush1.xpose.msra.mxu0 0.0
    %879 = vmatprep.subr.mxu0 0.0
    %880 = vmatpush1.xpose.msra.mxu0 0.0
    %881 = vmatprep.subr.mxu0 0.0
    %882 = vmatpush1.xpose.msra.mxu0 0.0
    %883 = vmatprep.subr.mxu0 0.0
    %884 = vmatpush1.xpose.msra.mxu0 0.0
    %885 = vmatprep.subr.mxu0 0.0
    %886 = vmatpush1.xpose.msra.mxu0 0.0
    %887 = vmatprep.subr.mxu0 0.0
    %888 = vmatpush1.xpose.msra.mxu0 0.0
    %889 = vmatprep.subr.mxu0 0.0
    %890 = vmatpush1.xpose.msra.mxu0 0.0
    %891 = vmatprep.mubr.f32.mxu0 0.0
    %892 = vmatmul.mubr.f32.gmra.mrb[0].mxu0 %v823
    %v893 = vpop.f32.mrb[0].mxu0
    %v894 = vadd.f32 0.0, %v893
    %v895 = vpop.f32.mrb[0].mxu0
    %896 = vdwg.mxu0
    %897 = vrot.lane.b32.xlu0 %v133, 112
    %v898 = vpop.permute.xlu0 %897
    %899 = vrot.lane.b32.xlu0 %v133, 80
    %v900 = vpop.permute.xlu0 %899
    %v901 = vsel %vm146, %v898, 0
    %v903 = vsel %vm146, %v900, 0
    %905 = vmatprep.subr.mxu0 0.0
    %906 = vmatpush1.xpose.msra.mxu0 %v903
    %907 = vmatprep.subr.mxu0 0.0
    %908 = vmatpush1.xpose.msra.mxu0 0.0
    %909 = vmatprep.subr.mxu0 0.0
    %910 = vmatpush1.xpose.msra.mxu0 0.0
    %911 = vmatprep.subr.mxu0 0.0
    %912 = vmatpush1.xpose.msra.mxu0 0.0
    %913 = vmatprep.subr.mxu0 0.0
    %914 = vmatpush1.xpose.msra.mxu0 0.0
    %915 = vmatprep.subr.mxu0 0.0
    %916 = vmatpush1.xpose.msra.mxu0 0.0
    %917 = vmatprep.subr.mxu0 0.0
    %918 = vmatpush1.xpose.msra.mxu0 0.0
    %919 = vmatprep.subr.mxu0 0.0
    %920 = vmatpush1.xpose.msra.mxu0 0.0
    %921 = vmatprep.subr.mxu0 0.0
    %922 = vmatpush1.xpose.msra.mxu0 0.0
    %923 = vmatprep.subr.mxu0 0.0
    %924 = vmatpush1.xpose.msra.mxu0 0.0
    %925 = vmatprep.subr.mxu0 0.0
    %926 = vmatpush1.xpose.msra.mxu0 0.0
    %927 = vmatprep.subr.mxu0 0.0
    %928 = vmatpush1.xpose.msra.mxu0 0.0
    %929 = vmatprep.subr.mxu0 0.0
    %930 = vmatpush1.xpose.msra.mxu0 0.0
    %931 = vmatprep.subr.mxu0 0.0
    %932 = vmatpush1.xpose.msra.mxu0 0.0
    %933 = vmatprep.subr.mxu0 0.0
    %934 = vmatpush1.xpose.msra.mxu0 0.0
    %935 = vmatprep.subr.mxu0 0.0
    %936 = vmatpush1.xpose.msra.mxu0 0.0
    %937 = vmatprep.subr.mxu0 0.0
    %938 = vmatpush1.xpose.msra.mxu0 0.0
    %939 = vmatprep.subr.mxu0 0.0
    %940 = vmatpush1.xpose.msra.mxu0 0.0
    %941 = vmatprep.subr.mxu0 0.0
    %942 = vmatpush1.xpose.msra.mxu0 0.0
    %943 = vmatprep.subr.mxu0 0.0
    %944 = vmatpush1.xpose.msra.mxu0 0.0
    %945 = vmatprep.subr.mxu0 0.0
    %946 = vmatpush1.xpose.msra.mxu0 0.0
    %947 = vmatprep.subr.mxu0 0.0
    %948 = vmatpush1.xpose.msra.mxu0 0.0
    %949 = vmatprep.subr.mxu0 0.0
    %950 = vmatpush1.xpose.msra.mxu0 0.0
    %951 = vmatprep.subr.mxu0 0.0
    %952 = vmatpush1.xpose.msra.mxu0 0.0
    %953 = vmatprep.subr.mxu0 0.0
    %954 = vmatpush1.xpose.msra.mxu0 0.0
    %955 = vmatprep.subr.mxu0 0.0
    %956 = vmatpush1.xpose.msra.mxu0 0.0
    %957 = vmatprep.subr.mxu0 0.0
    %958 = vmatpush1.xpose.msra.mxu0 0.0
    %959 = vmatprep.subr.mxu0 0.0
    %960 = vmatpush1.xpose.msra.mxu0 0.0
    %961 = vmatprep.subr.mxu0 0.0
    %962 = vmatpush1.xpose.msra.mxu0 0.0
    %963 = vmatprep.subr.mxu0 0.0
    %964 = vmatpush1.xpose.msra.mxu0 0.0
    %965 = vmatprep.subr.mxu0 0.0
    %966 = vmatpush1.xpose.msra.mxu0 0.0
    %967 = vmatprep.subr.mxu0 0.0
    %968 = vmatpush1.xpose.msra.mxu0 0.0
    %969 = vmatprep.mubr.f32.mxu0 0.0
    %970 = vmatmul.mubr.f32.gmra.mrb[0].mxu0 %v901
    %v971 = vpop.f32.mrb[0].mxu0
    %v972 = vadd.f32 0.0, %v971
    %v973 = vpop.f32.mrb[0].mxu0
    %974 = vdwg.mxu0
    %v975 = vsel %vm142, %v894, -1e+30
    %v976 = vsel %vm142, %v972, -1e+30
    %v977 = vsel %vm146, %v975, -inf
    %978 = vmax.xlane.f32.xlu0 %v977
    %v979 = vpop.xlane.xlu0 %978
    %v980 = vsel %vm146, %v976, -inf
    %981 = vmax.xlane.f32.xlu0 %v980
    %v982 = vpop.xlane.xlu0 %981
    %v983 = vsub.f32 %v975, %v979
    %v984 = vsub.f32 %v976, %v982
    %v985 = vmul.f32 %v983, 1.442695
    %v986 = vpow.pop %v985
    %v987 = vmul.f32 %v984, 1.442695
    %v988 = vpow.pop %v987
    %v989 = vsel %vm146, %v986, 0.0
    %990 = vadd.xlane.f32.xlu0 %v989
    %v991 = vpop.xlane.xlu0 %990
    %v992 = vsel %vm146, %v988, 0.0
    %993 = vadd.xlane.f32.xlu0 %v992
    %v994 = vpop.xlane.xlu0 %993
    %v995 = vrcp.pop %v991
    %v996 = vrcp.pop %v994
    %v997 = vmul.f32 %v986, %v995
    %v998 = vmul.f32 %v988, %v996
    %999 = vrot.lane.b32.xlu0 %v128, 48
    %v1000 = vpop.permute.xlu0 %999
    %v1003 = vsel %vm146, %v997, 0
    %1005 = vmatprep.subr.mxu0 0.0
    %1006 = vmatpush1.msra.mxu0 %v1000
    %1007 = vmatprep.subr.mxu0 0.0
    %1008 = vmatpush1.msra.mxu0 0.0
    %1009 = vmatprep.subr.mxu0 0.0
    %1010 = vmatpush1.msra.mxu0 0.0
    %1011 = vmatprep.subr.mxu0 0.0
    %1012 = vmatpush1.msra.mxu0 0.0
    %1013 = vmatprep.subr.mxu0 0.0
    %1014 = vmatpush1.msra.mxu0 0.0
    %1015 = vmatprep.subr.mxu0 0.0
    %1016 = vmatpush1.msra.mxu0 0.0
    %1017 = vmatprep.subr.mxu0 0.0
    %1018 = vmatpush1.msra.mxu0 0.0
    %1019 = vmatprep.subr.mxu0 0.0
    %1020 = vmatpush1.msra.mxu0 0.0
    %1021 = vmatprep.subr.mxu0 0.0
    %1022 = vmatpush1.msra.mxu0 0.0
    %1023 = vmatprep.subr.mxu0 0.0
    %1024 = vmatpush1.msra.mxu0 0.0
    %1025 = vmatprep.subr.mxu0 0.0
    %1026 = vmatpush1.msra.mxu0 0.0
    %1027 = vmatprep.subr.mxu0 0.0
    %1028 = vmatpush1.msra.mxu0 0.0
    %1029 = vmatprep.subr.mxu0 0.0
    %1030 = vmatpush1.msra.mxu0 0.0
    %1031 = vmatprep.subr.mxu0 0.0
    %1032 = vmatpush1.msra.mxu0 0.0
    %1033 = vmatprep.subr.mxu0 0.0
    %1034 = vmatpush1.msra.mxu0 0.0
    %1035 = vmatprep.subr.mxu0 0.0
    %1036 = vmatpush1.msra.mxu0 0.0
    %1037 = vmatprep.subr.mxu0 0.0
    %1038 = vmatpush1.msra.mxu0 0.0
    %1039 = vmatprep.subr.mxu0 0.0
    %1040 = vmatpush1.msra.mxu0 0.0
    %1041 = vmatprep.subr.mxu0 0.0
    %1042 = vmatpush1.msra.mxu0 0.0
    %1043 = vmatprep.subr.mxu0 0.0
    %1044 = vmatpush1.msra.mxu0 0.0
    %1045 = vmatprep.subr.mxu0 0.0
    %1046 = vmatpush1.msra.mxu0 0.0
    %1047 = vmatprep.subr.mxu0 0.0
    %1048 = vmatpush1.msra.mxu0 0.0
    %1049 = vmatprep.subr.mxu0 0.0
    %1050 = vmatpush1.msra.mxu0 0.0
    %1051 = vmatprep.subr.mxu0 0.0
    %1052 = vmatpush1.msra.mxu0 0.0
    %1053 = vmatprep.subr.mxu0 0.0
    %1054 = vmatpush1.msra.mxu0 0.0
    %1055 = vmatprep.subr.mxu0 0.0
    %1056 = vmatpush1.msra.mxu0 0.0
    %1057 = vmatprep.subr.mxu0 0.0
    %1058 = vmatpush1.msra.mxu0 0.0
    %1059 = vmatprep.subr.mxu0 0.0
    %1060 = vmatpush1.msra.mxu0 0.0
    %1061 = vmatprep.subr.mxu0 0.0
    %1062 = vmatpush1.msra.mxu0 0.0
    %1063 = vmatprep.subr.mxu0 0.0
    %1064 = vmatpush1.msra.mxu0 0.0
    %1065 = vmatprep.subr.mxu0 0.0
    %1066 = vmatpush1.msra.mxu0 0.0
    %1067 = vmatprep.subr.mxu0 0.0
    %1068 = vmatpush1.msra.mxu0 0.0
    %1069 = vmatprep.mubr.f32.mxu0 0.0
    %1070 = vmatmul.mubr.f32.gmra.mrb[0].mxu0 %v1003
    %v1071 = vpop.f32.mrb[0].mxu0
    %v1072 = vadd.f32 0.0, %v1071
    %v1073 = vpop.f32.mrb[0].mxu0
    %1074 = vdwg.mxu0
    %1075 = vrot.lane.b32.xlu0 %v133, 48
    %v1076 = vpop.permute.xlu0 %1075
    %v1079 = vsel %vm146, %v998, 0
    %1081 = vmatprep.subr.mxu0 0.0
    %1082 = vmatpush1.msra.mxu0 %v1076
    %1083 = vmatprep.subr.mxu0 0.0
    %1084 = vmatpush1.msra.mxu0 0.0
    %1085 = vmatprep.subr.mxu0 0.0
    %1086 = vmatpush1.msra.mxu0 0.0
    %1087 = vmatprep.subr.mxu0 0.0
    %1088 = vmatpush1.msra.mxu0 0.0
    %1089 = vmatprep.subr.mxu0 0.0
    %1090 = vmatpush1.msra.mxu0 0.0
    %1091 = vmatprep.subr.mxu0 0.0
    %1092 = vmatpush1.msra.mxu0 0.0
    %1093 = vmatprep.subr.mxu0 0.0
    %1094 = vmatpush1.msra.mxu0 0.0
    %1095 = vmatprep.subr.mxu0 0.0
    %1096 = vmatpush1.msra.mxu0 0.0
    %1097 = vmatprep.subr.mxu0 0.0
    %1098 = vmatpush1.msra.mxu0 0.0
    %1099 = vmatprep.subr.mxu0 0.0
    %1100 = vmatpush1.msra.mxu0 0.0
    %1101 = vmatprep.subr.mxu0 0.0
    %1102 = vmatpush1.msra.mxu0 0.0
    %1103 = vmatprep.subr.mxu0 0.0
    %1104 = vmatpush1.msra.mxu0 0.0
    %1105 = vmatprep.subr.mxu0 0.0
    %1106 = vmatpush1.msra.mxu0 0.0
    %1107 = vmatprep.subr.mxu0 0.0
    %1108 = vmatpush1.msra.mxu0 0.0
    %1109 = vmatprep.subr.mxu0 0.0
    %1110 = vmatpush1.msra.mxu0 0.0
    %1111 = vmatprep.subr.mxu0 0.0
    %1112 = vmatpush1.msra.mxu0 0.0
    %1113 = vmatprep.subr.mxu0 0.0
    %1114 = vmatpush1.msra.mxu0 0.0
    %1115 = vmatprep.subr.mxu0 0.0
    %1116 = vmatpush1.msra.mxu0 0.0
    %1117 = vmatprep.subr.mxu0 0.0
    %1118 = vmatpush1.msra.mxu0 0.0
    %1119 = vmatprep.subr.mxu0 0.0
    %1120 = vmatpush1.msra.mxu0 0.0
    %1121 = vmatprep.subr.mxu0 0.0
    %1122 = vmatpush1.msra.mxu0 0.0
    %1123 = vmatprep.subr.mxu0 0.0
    %1124 = vmatpush1.msra.mxu0 0.0
    %1125 = vmatprep.subr.mxu0 0.0
    %1126 = vmatpush1.msra.mxu0 0.0
    %1127 = vmatprep.subr.mxu0 0.0
    %1128 = vmatpush1.msra.mxu0 0.0
    %1129 = vmatprep.subr.mxu0 0.0
    %1130 = vmatpush1.msra.mxu0 0.0
    %1131 = vmatprep.subr.mxu0 0.0
    %1132 = vmatpush1.msra.mxu0 0.0
    %1133 = vmatprep.subr.mxu0 0.0
    %1134 = vmatpush1.msra.mxu0 0.0
    %1135 = vmatprep.subr.mxu0 0.0
    %1136 = vmatpush1.msra.mxu0 0.0
    %1137 = vmatprep.subr.mxu0 0.0
    %1138 = vmatpush1.msra.mxu0 0.0
    %1139 = vmatprep.subr.mxu0 0.0
    %1140 = vmatpush1.msra.mxu0 0.0
    %1141 = vmatprep.subr.mxu0 0.0
    %1142 = vmatpush1.msra.mxu0 0.0
    %1143 = vmatprep.subr.mxu0 0.0
    %1144 = vmatpush1.msra.mxu0 0.0
    %1145 = vmatprep.mubr.f32.mxu0 0.0
    %1146 = vmatmul.mubr.f32.gmra.mrb[0].mxu0 %v1079
    %v1147 = vpop.f32.mrb[0].mxu0
    %v1148 = vadd.f32 0.0, %v1147
    %v1149 = vpop.f32.mrb[0].mxu0
    %1150 = vdwg.mxu0
    %1153 = vrot.lane.b32.xlu0 %v1072, 16
    %v1154 = vpop.permute.xlu0 %1153
    %1155 = vrot.lane.b32.xlu0 %v1148, 16
    %v1156 = vpop.permute.xlu0 %1155
    %vm1159 = vcmask 195712
    %1160 = vst.msk [vmem:[#allocation2] sm:$0xff] %vm1159, %v1154
    %1161 = vst.msk [vmem:[#allocation2 + $0x8] sm:$0xff] %vm1159, %v1156
    %1162 = vrot.lane.b32.xlu0 %v128, 104
    %v1163 = vpop.permute.xlu0 %1162
    %1164 = vrot.lane.b32.xlu0 %v128, 72
    %v1165 = vpop.permute.xlu0 %1164
    %v1166 = vsel %vm146, %v1163, 0
    %v1168 = vsel %vm146, %v1165, 0
    %1170 = vmatprep.subr.mxu0 0.0
    %1171 = vmatpush1.xpose.msra.mxu0 %v1168
    %1172 = vmatprep.subr.mxu0 0.0
    %1173 = vmatpush1.xpose.msra.mxu0 0.0
    %1174 = vmatprep.subr.mxu0 0.0
    %1175 = vmatpush1.xpose.msra.mxu0 0.0
    %1176 = vmatprep.subr.mxu0 0.0
    %1177 = vmatpush1.xpose.msra.mxu0 0.0
    %1178 = vmatprep.subr.mxu0 0.0
    %1179 = vmatpush1.xpose.msra.mxu0 0.0
    %1180 = vmatprep.subr.mxu0 0.0
    %1181 = vmatpush1.xpose.msra.mxu0 0.0
    %1182 = vmatprep.subr.mxu0 0.0
    %1183 = vmatpush1.xpose.msra.mxu0 0.0
    %1184 = vmatprep.subr.mxu0 0.0
    %1185 = vmatpush1.xpose.msra.mxu0 0.0
    %1186 = vmatprep.subr.mxu0 0.0
    %1187 = vmatpush1.xpose.msra.mxu0 0.0
    %1188 = vmatprep.subr.mxu0 0.0
    %1189 = vmatpush1.xpose.msra.mxu0 0.0
    %1190 = vmatprep.subr.mxu0 0.0
    %1191 = vmatpush1.xpose.msra.mxu0 0.0
    %1192 = vmatprep.subr.mxu0 0.0
    %1193 = vmatpush1.xpose.msra.mxu0 0.0
    %1194 = vmatprep.subr.mxu0 0.0
    %1195 = vmatpush1.xpose.msra.mxu0 0.0
    %1196 = vmatprep.subr.mxu0 0.0
    %1197 = vmatpush1.xpose.msra.mxu0 0.0
    %1198 = vmatprep.subr.mxu0 0.0
    %1199 = vmatpush1.xpose.msra.mxu0 0.0
    %1200 = vmatprep.subr.mxu0 0.0
    %1201 = vmatpush1.xpose.msra.mxu0 0.0
    %1202 = vmatprep.subr.mxu0 0.0
    %1203 = vmatpush1.xpose.msra.mxu0 0.0
    %1204 = vmatprep.subr.mxu0 0.0
    %1205 = vmatpush1.xpose.msra.mxu0 0.0
    %1206 = vmatprep.subr.mxu0 0.0
    %1207 = vmatpush1.xpose.msra.mxu0 0.0
    %1208 = vmatprep.subr.mxu0 0.0
    %1209 = vmatpush1.xpose.msra.mxu0 0.0
    %1210 = vmatprep.subr.mxu0 0.0
    %1211 = vmatpush1.xpose.msra.mxu0 0.0
    %1212 = vmatprep.subr.mxu0 0.0
    %1213 = vmatpush1.xpose.msra.mxu0 0.0
    %1214 = vmatprep.subr.mxu0 0.0
    %1215 = vmatpush1.xpose.msra.mxu0 0.0
    %1216 = vmatprep.subr.mxu0 0.0
    %1217 = vmatpush1.xpose.msra.mxu0 0.0
    %1218 = vmatprep.subr.mxu0 0.0
    %1219 = vmatpush1.xpose.msra.mxu0 0.0
    %1220 = vmatprep.subr.mxu0 0.0
    %1221 = vmatpush1.xpose.msra.mxu0 0.0
    %1222 = vmatprep.subr.mxu0 0.0
    %1223 = vmatpush1.xpose.msra.mxu0 0.0
    %1224 = vmatprep.subr.mxu0 0.0
    %1225 = vmatpush1.xpose.msra.mxu0 0.0
    %1226 = vmatprep.subr.mxu0 0.0
    %1227 = vmatpush1.xpose.msra.mxu0 0.0
    %1228 = vmatprep.subr.mxu0 0.0
    %1229 = vmatpush1.xpose.msra.mxu0 0.0
    %1230 = vmatprep.subr.mxu0 0.0
    %1231 = vmatpush1.xpose.msra.mxu0 0.0
    %1232 = vmatprep.subr.mxu0 0.0
    %1233 = vmatpush1.xpose.msra.mxu0 0.0
    %1234 = vmatprep.mubr.f32.mxu0 0.0
    %1235 = vmatmul.mubr.f32.gmra.mrb[0].mxu0 %v1166
    %v1236 = vpop.f32.mrb[0].mxu0
    %v1237 = vadd.f32 0.0, %v1236
    %v1238 = vpop.f32.mrb[0].mxu0
    %1239 = vdwg.mxu0
    %1240 = vrot.lane.b32.xlu0 %v133, 104
    %v1241 = vpop.permute.xlu0 %1240
    %1242 = vrot.lane.b32.xlu0 %v133, 72
    %v1243 = vpop.permute.xlu0 %1242
    %v1244 = vsel %vm146, %v1241, 0
    %v1246 = vsel %vm146, %v1243, 0
    %1248 = vmatprep.subr.mxu0 0.0
    %1249 = vmatpush1.xpose.msra.mxu0 %v1246
    %1250 = vmatprep.subr.mxu0 0.0
    %1251 = vmatpush1.xpose.msra.mxu0 0.0
    %1252 = vmatprep.subr.mxu0 0.0
    %1253 = vmatpush1.xpose.msra.mxu0 0.0
    %1254 = vmatprep.subr.mxu0 0.0
    %1255 = vmatpush1.xpose.msra.mxu0 0.0
    %1256 = vmatprep.subr.mxu0 0.0
    %1257 = vmatpush1.xpose.msra.mxu0 0.0
    %1258 = vmatprep.subr.mxu0 0.0
    %1259 = vmatpush1.xpose.msra.mxu0 0.0
    %1260 = vmatprep.subr.mxu0 0.0
    %1261 = vmatpush1.xpose.msra.mxu0 0.0
    %1262 = vmatprep.subr.mxu0 0.0
    %1263 = vmatpush1.xpose.msra.mxu0 0.0
    %1264 = vmatprep.subr.mxu0 0.0
    %1265 = vmatpush1.xpose.msra.mxu0 0.0
    %1266 = vmatprep.subr.mxu0 0.0
    %1267 = vmatpush1.xpose.msra.mxu0 0.0
    %1268 = vmatprep.subr.mxu0 0.0
    %1269 = vmatpush1.xpose.msra.mxu0 0.0
    %1270 = vmatprep.subr.mxu0 0.0
    %1271 = vmatpush1.xpose.msra.mxu0 0.0
    %1272 = vmatprep.subr.mxu0 0.0
    %1273 = vmatpush1.xpose.msra.mxu0 0.0
    %1274 = vmatprep.subr.mxu0 0.0
    %1275 = vmatpush1.xpose.msra.mxu0 0.0
    %1276 = vmatprep.subr.mxu0 0.0
    %1277 = vmatpush1.xpose.msra.mxu0 0.0
    %1278 = vmatprep.subr.mxu0 0.0
    %1279 = vmatpush1.xpose.msra.mxu0 0.0
    %1280 = vmatprep.subr.mxu0 0.0
    %1281 = vmatpush1.xpose.msra.mxu0 0.0
    %1282 = vmatprep.subr.mxu0 0.0
    %1283 = vmatpush1.xpose.msra.mxu0 0.0
    %1284 = vmatprep.subr.mxu0 0.0
    %1285 = vmatpush1.xpose.msra.mxu0 0.0
    %1286 = vmatprep.subr.mxu0 0.0
    %1287 = vmatpush1.xpose.msra.mxu0 0.0
    %1288 = vmatprep.subr.mxu0 0.0
    %1289 = vmatpush1.xpose.msra.mxu0 0.0
    %1290 = vmatprep.subr.mxu0 0.0
    %1291 = vmatpush1.xpose.msra.mxu0 0.0
    %1292 = vmatprep.subr.mxu0 0.0
    %1293 = vmatpush1.xpose.msra.mxu0 0.0
    %1294 = vmatprep.subr.mxu0 0.0
    %1295 = vmatpush1.xpose.msra.mxu0 0.0
    %1296 = vmatprep.subr.mxu0 0.0
    %1297 = vmatpush1.xpose.msra.mxu0 0.0
    %1298 = vmatprep.subr.mxu0 0.0
    %1299 = vmatpush1.xpose.msra.mxu0 0.0
    %1300 = vmatprep.subr.mxu0 0.0
    %1301 = vmatpush1.xpose.msra.mxu0 0.0
    %1302 = vmatprep.subr.mxu0 0.0
    %1303 = vmatpush1.xpose.msra.mxu0 0.0
    %1304 = vmatprep.subr.mxu0 0.0
    %1305 = vmatpush1.xpose.msra.mxu0 0.0
    %1306 = vmatprep.subr.mxu0 0.0
    %1307 = vmatpush1.xpose.msra.mxu0 0.0
    %1308 = vmatprep.subr.mxu0 0.0
    %1309 = vmatpush1.xpose.msra.mxu0 0.0
    %1310 = vmatprep.subr.mxu0 0.0
    %1311 = vmatpush1.xpose.msra.mxu0 0.0
    %1312 = vmatprep.mubr.f32.mxu0 0.0
    %1313 = vmatmul.mubr.f32.gmra.mrb[0].mxu0 %v1244
    %v1314 = vpop.f32.mrb[0].mxu0
    %v1315 = vadd.f32 0.0, %v1314
    %v1316 = vpop.f32.mrb[0].mxu0
    %1317 = vdwg.mxu0
    %v1318 = vsel %vm142, %v1237, -1e+30
    %v1319 = vsel %vm142, %v1315, -1e+30
    %v1320 = vsel %vm146, %v1318, -inf
    %1321 = vmax.xlane.f32.xlu0 %v1320
    %v1322 = vpop.xlane.xlu0 %1321
    %v1323 = vsel %vm146, %v1319, -inf
    %1324 = vmax.xlane.f32.xlu0 %v1323
    %v1325 = vpop.xlane.xlu0 %1324
    %v1326 = vsub.f32 %v1318, %v1322
    %v1327 = vsub.f32 %v1319, %v1325
    %v1328 = vmul.f32 %v1326, 1.442695
    %v1329 = vpow.pop %v1328
    %v1330 = vmul.f32 %v1327, 1.442695
    %v1331 = vpow.pop %v1330
    %v1332 = vsel %vm146, %v1329, 0.0
    %1333 = vadd.xlane.f32.xlu0 %v1332
    %v1334 = vpop.xlane.xlu0 %1333
    %v1335 = vsel %vm146, %v1331, 0.0
    %1336 = vadd.xlane.f32.xlu0 %v1335
    %v1337 = vpop.xlane.xlu0 %1336
    %v1338 = vrcp.pop %v1334
    %v1339 = vrcp.pop %v1337
    %v1340 = vmul.f32 %v1329, %v1338
    %v1341 = vmul.f32 %v1331, %v1339
    %1342 = vrot.lane.b32.xlu0 %v128, 40
    %v1343 = vpop.permute.xlu0 %1342
    %v1346 = vsel %vm146, %v1340, 0
    %1348 = vmatprep.subr.mxu0 0.0
    %1349 = vmatpush1.msra.mxu0 %v1343
    %1350 = vmatprep.subr.mxu0 0.0
    %1351 = vmatpush1.msra.mxu0 0.0
    %1352 = vmatprep.subr.mxu0 0.0
    %1353 = vmatpush1.msra.mxu0 0.0
    %1354 = vmatprep.subr.mxu0 0.0
    %1355 = vmatpush1.msra.mxu0 0.0
    %1356 = vmatprep.subr.mxu0 0.0
    %1357 = vmatpush1.msra.mxu0 0.0
    %1358 = vmatprep.subr.mxu0 0.0
    %1359 = vmatpush1.msra.mxu0 0.0
    %1360 = vmatprep.subr.mxu0 0.0
    %1361 = vmatpush1.msra.mxu0 0.0
    %1362 = vmatprep.subr.mxu0 0.0
    %1363 = vmatpush1.msra.mxu0 0.0
    %1364 = vmatprep.subr.mxu0 0.0
    %1365 = vmatpush1.msra.mxu0 0.0
    %1366 = vmatprep.subr.mxu0 0.0
    %1367 = vmatpush1.msra.mxu0 0.0
    %1368 = vmatprep.subr.mxu0 0.0
    %1369 = vmatpush1.msra.mxu0 0.0
    %1370 = vmatprep.subr.mxu0 0.0
    %1371 = vmatpush1.msra.mxu0 0.0
    %1372 = vmatprep.subr.mxu0 0.0
    %1373 = vmatpush1.msra.mxu0 0.0
    %1374 = vmatprep.subr.mxu0 0.0
    %1375 = vmatpush1.msra.mxu0 0.0
    %1376 = vmatprep.subr.mxu0 0.0
    %1377 = vmatpush1.msra.mxu0 0.0
    %1378 = vmatprep.subr.mxu0 0.0
    %1379 = vmatpush1.msra.mxu0 0.0
    %1380 = vmatprep.subr.mxu0 0.0
    %1381 = vmatpush1.msra.mxu0 0.0
    %1382 = vmatprep.subr.mxu0 0.0
    %1383 = vmatpush1.msra.mxu0 0.0
    %1384 = vmatprep.subr.mxu0 0.0
    %1385 = vmatpush1.msra.mxu0 0.0
    %1386 = vmatprep.subr.mxu0 0.0
    %1387 = vmatpush1.msra.mxu0 0.0
    %1388 = vmatprep.subr.mxu0 0.0
    %1389 = vmatpush1.msra.mxu0 0.0
    %1390 = vmatprep.subr.mxu0 0.0
    %1391 = vmatpush1.msra.mxu0 0.0
    %1392 = vmatprep.subr.mxu0 0.0
    %1393 = vmatpush1.msra.mxu0 0.0
    %1394 = vmatprep.subr.mxu0 0.0
    %1395 = vmatpush1.msra.mxu0 0.0
    %1396 = vmatprep.subr.mxu0 0.0
    %1397 = vmatpush1.msra.mxu0 0.0
    %1398 = vmatprep.subr.mxu0 0.0
    %1399 = vmatpush1.msra.mxu0 0.0
    %1400 = vmatprep.subr.mxu0 0.0
    %1401 = vmatpush1.msra.mxu0 0.0
    %1402 = vmatprep.subr.mxu0 0.0
    %1403 = vmatpush1.msra.mxu0 0.0
    %1404 = vmatprep.subr.mxu0 0.0
    %1405 = vmatpush1.msra.mxu0 0.0
    %1406 = vmatprep.subr.mxu0 0.0
    %1407 = vmatpush1.msra.mxu0 0.0
    %1408 = vmatprep.subr.mxu0 0.0
    %1409 = vmatpush1.msra.mxu0 0.0
    %1410 = vmatprep.subr.mxu0 0.0
    %1411 = vmatpush1.msra.mxu0 0.0
    %1412 = vmatprep.mubr.f32.mxu0 0.0
    %1413 = vmatmul.mubr.f32.gmra.mrb[0].mxu0 %v1346
    %v1414 = vpop.f32.mrb[0].mxu0
    %v1415 = vadd.f32 0.0, %v1414
    %v1416 = vpop.f32.mrb[0].mxu0
    %1417 = vdwg.mxu0
    %1418 = vrot.lane.b32.xlu0 %v133, 40
    %v1419 = vpop.permute.xlu0 %1418
    %v1422 = vsel %vm146, %v1341, 0
    %1424 = vmatprep.subr.mxu0 0.0
    %1425 = vmatpush1.msra.mxu0 %v1419
    %1426 = vmatprep.subr.mxu0 0.0
    %1427 = vmatpush1.msra.mxu0 0.0
    %1428 = vmatprep.subr.mxu0 0.0
    %1429 = vmatpush1.msra.mxu0 0.0
    %1430 = vmatprep.subr.mxu0 0.0
    %1431 = vmatpush1.msra.mxu0 0.0
    %1432 = vmatprep.subr.mxu0 0.0
    %1433 = vmatpush1.msra.mxu0 0.0
    %1434 = vmatprep.subr.mxu0 0.0
    %1435 = vmatpush1.msra.mxu0 0.0
    %1436 = vmatprep.subr.mxu0 0.0
    %1437 = vmatpush1.msra.mxu0 0.0
    %1438 = vmatprep.subr.mxu0 0.0
    %1439 = vmatpush1.msra.mxu0 0.0
    %1440 = vmatprep.subr.mxu0 0.0
    %1441 = vmatpush1.msra.mxu0 0.0
    %1442 = vmatprep.subr.mxu0 0.0
    %1443 = vmatpush1.msra.mxu0 0.0
    %1444 = vmatprep.subr.mxu0 0.0
    %1445 = vmatpush1.msra.mxu0 0.0
    %1446 = vmatprep.subr.mxu0 0.0
    %1447 = vmatpush1.msra.mxu0 0.0
    %1448 = vmatprep.subr.mxu0 0.0
    %1449 = vmatpush1.msra.mxu0 0.0
    %1450 = vmatprep.subr.mxu0 0.0
    %1451 = vmatpush1.msra.mxu0 0.0
    %1452 = vmatprep.subr.mxu0 0.0
    %1453 = vmatpush1.msra.mxu0 0.0
    %1454 = vmatprep.subr.mxu0 0.0
    %1455 = vmatpush1.msra.mxu0 0.0
    %1456 = vmatprep.subr.mxu0 0.0
    %1457 = vmatpush1.msra.mxu0 0.0
    %1458 = vmatprep.subr.mxu0 0.0
    %1459 = vmatpush1.msra.mxu0 0.0
    %1460 = vmatprep.subr.mxu0 0.0
    %1461 = vmatpush1.msra.mxu0 0.0
    %1462 = vmatprep.subr.mxu0 0.0
    %1463 = vmatpush1.msra.mxu0 0.0
    %1464 = vmatprep.subr.mxu0 0.0
    %1465 = vmatpush1.msra.mxu0 0.0
    %1466 = vmatprep.subr.mxu0 0.0
    %1467 = vmatpush1.msra.mxu0 0.0
    %1468 = vmatprep.subr.mxu0 0.0
    %1469 = vmatpush1.msra.mxu0 0.0
    %1470 = vmatprep.subr.mxu0 0.0
    %1471 = vmatpush1.msra.mxu0 0.0
    %1472 = vmatprep.subr.mxu0 0.0
    %1473 = vmatpush1.msra.mxu0 0.0
    %1474 = vmatprep.subr.mxu0 0.0
    %1475 = vmatpush1.msra.mxu0 0.0
    %1476 = vmatprep.subr.mxu0 0.0
    %1477 = vmatpush1.msra.mxu0 0.0
    %1478 = vmatprep.subr.mxu0 0.0
    %1479 = vmatpush1.msra.mxu0 0.0
    %1480 = vmatprep.subr.mxu0 0.0
    %1481 = vmatpush1.msra.mxu0 0.0
    %1482 = vmatprep.subr.mxu0 0.0
    %1483 = vmatpush1.msra.mxu0 0.0
    %1484 = vmatprep.subr.mxu0 0.0
    %1485 = vmatpush1.msra.mxu0 0.0
    %1486 = vmatprep.subr.mxu0 0.0
    %1487 = vmatpush1.msra.mxu0 0.0
    %1488 = vmatprep.mubr.f32.mxu0 0.0
    %1489 = vmatmul.mubr.f32.gmra.mrb[0].mxu0 %v1422
    %v1490 = vpop.f32.mrb[0].mxu0
    %v1491 = vadd.f32 0.0, %v1490
    %v1492 = vpop.f32.mrb[0].mxu0
    %1493 = vdwg.mxu0
    %1496 = vrot.lane.b32.xlu0 %v1415, 24
    %v1497 = vpop.permute.xlu0 %1496
    %1498 = vrot.lane.b32.xlu0 %v1491, 24
    %v1499 = vpop.permute.xlu0 %1498
    %vm1502 = vcmask 261312
    %1503 = vst.msk [vmem:[#allocation2] sm:$0xff] %vm1502, %v1497
    %1504 = vst.msk [vmem:[#allocation2 + $0x8] sm:$0xff] %vm1502, %v1499
    %v1505 = vld [vmem:[#allocation2] sm:$0xff]
    %v1506 = vld [vmem:[#allocation2 + $0x8] sm:$0xff]
    %v1507 = vld [vmem:[#allocation3] sm:$0xff]
    %v1508 = vld [vmem:[#allocation3 + $0x8] sm:$0xff]
    %v1509 = vld [vmem:[#allocation3 + $0x10] sm:$0xff]
    %v1510 = vld [vmem:[#allocation3 + $0x18] sm:$0xff]
    %v1511 = vld [vmem:[%s4] sm:$0x1]
    %v1513 = vlaneseq
    %v1514 = vshrl.u32 %v1513, 7
    %v1515 = vsub.s32 0, %v1514
    %v1516 = vrot.slane %v1511, %v1515
    %v1519 = vsel %vm54, %v1505, 0
    %v1522 = vsel %vm54, %v1506, 0
    %1524 = vmatprep.subr.mxu0 0.0
    %1525 = vmatpush1.msra.mxu0 %v1507
    %1526 = vmatprep.subr.mxu0 0.0
    %1527 = vmatpush1.msra.mxu0 %v1508
    %1528 = vmatprep.subr.mxu0 0.0
    %1529 = vmatpush1.msra.mxu0 %v1509
    %1530 = vmatprep.subr.mxu0 0.0
    %1531 = vmatpush1.msra.mxu0 %v1510
    %1532 = vmatprep.subr.mxu0 0.0
    %1533 = vmatpush1.msra.mxu0 0.0
    %1534 = vmatprep.subr.mxu0 0.0
    %1535 = vmatpush1.msra.mxu0 0.0
    %1536 = vmatprep.subr.mxu0 0.0
    %1537 = vmatpush1.msra.mxu0 0.0
    %1538 = vmatprep.subr.mxu0 0.0
    %1539 = vmatpush1.msra.mxu0 0.0
    %1540 = vmatprep.subr.mxu0 0.0
    %1541 = vmatpush1.msra.mxu0 0.0
    %1542 = vmatprep.subr.mxu0 0.0
    %1543 = vmatpush1.msra.mxu0 0.0
    %1544 = vmatprep.subr.mxu0 0.0
    %1545 = vmatpush1.msra.mxu0 0.0
    %1546 = vmatprep.subr.mxu0 0.0
    %1547 = vmatpush1.msra.mxu0 0.0
    %1548 = vmatprep.subr.mxu0 0.0
    %1549 = vmatpush1.msra.mxu0 0.0
    %1550 = vmatprep.subr.mxu0 0.0
    %1551 = vmatpush1.msra.mxu0 0.0
    %1552 = vmatprep.subr.mxu0 0.0
    %1553 = vmatpush1.msra.mxu0 0.0
    %1554 = vmatprep.subr.mxu0 0.0
    %1555 = vmatpush1.msra.mxu0 0.0
    %1556 = vmatprep.subr.mxu0 0.0
    %1557 = vmatpush1.msra.mxu0 0.0
    %1558 = vmatprep.subr.mxu0 0.0
    %1559 = vmatpush1.msra.mxu0 0.0
    %1560 = vmatprep.subr.mxu0 0.0
    %1561 = vmatpush1.msra.mxu0 0.0
    %1562 = vmatprep.subr.mxu0 0.0
    %1563 = vmatpush1.msra.mxu0 0.0
    %1564 = vmatprep.subr.mxu0 0.0
    %1565 = vmatpush1.msra.mxu0 0.0
    %1566 = vmatprep.subr.mxu0 0.0
    %1567 = vmatpush1.msra.mxu0 0.0
    %1568 = vmatprep.subr.mxu0 0.0
    %1569 = vmatpush1.msra.mxu0 0.0
    %1570 = vmatprep.subr.mxu0 0.0
    %1571 = vmatpush1.msra.mxu0 0.0
    %1572 = vmatprep.subr.mxu0 0.0
    %1573 = vmatpush1.msra.mxu0 0.0
    %1574 = vmatprep.subr.mxu0 0.0
    %1575 = vmatpush1.msra.mxu0 0.0
    %1576 = vmatprep.subr.mxu0 0.0
    %1577 = vmatpush1.msra.mxu0 0.0
    %1578 = vmatprep.subr.mxu0 0.0
    %1579 = vmatpush1.msra.mxu0 0.0
    %1580 = vmatprep.subr.mxu0 0.0
    %1581 = vmatpush1.msra.mxu0 0.0
    %1582 = vmatprep.subr.mxu0 0.0
    %1583 = vmatpush1.msra.mxu0 0.0
    %1584 = vmatprep.subr.mxu0 0.0
    %1585 = vmatpush1.msra.mxu0 0.0
    %1586 = vmatprep.subr.mxu0 0.0
    %1587 = vmatpush1.msra.mxu0 0.0
    %1588 = vmatprep.mubr.f32.mxu0 0.0
    %1589 = vmatmul.mubr.f32.gmra.mrb[0].mxu0 %v1519
    %v1590 = vpop.f32.mrb[0].mxu0
    %v1591 = vadd.f32 %v1516, %v1590
    %v1592 = vpop.f32.mrb[0].mxu0
    %1593 = vmatprep.mubr.f32.mxu0 0.0
    %1594 = vmatmul.mubr.f32.gmra.mrb[0].mxu0 %v1522
    %v1595 = vpop.f32.mrb[0].mxu0
    %v1596 = vadd.f32 %v1516, %v1595
    %v1597 = vpop.f32.mrb[0].mxu0
    %1598 = vdwg.mxu0
    %v1599 = vmax.f32 %v1591, 0.0
    %v1600 = vmax.f32 %v1596, 0.0
    %v1601 = vld [vmem:[%s5] sm:$0xff]
    %v1602 = vld [vmem:[%s5 + $0x8] sm:$0xff]
    %v1603 = vld [vmem:[%s5 + $0x10] sm:$0xff]
    %v1604 = vld [vmem:[%s5 + $0x18] sm:$0xff]
    %v1605 = vld [vmem:[%s6] sm:$0x1]
    %v1607 = vlaneseq
    %v1608 = vshrl.u32 %v1607, 7
    %v1609 = vsub.s32 0, %v1608
    %v1610 = vrot.slane %v1605, %v1609
    %v1613 = vsel %vm54, %v1599, 0
    %v1616 = vsel %vm54, %v1600, 0
    %1618 = vmatprep.subr.mxu0 0.0
    %1619 = vmatpush1.msra.mxu0 %v1601
    %1620 = vmatprep.subr.mxu0 0.0
    %1621 = vmatpush1.msra.mxu0 %v1602
    %1622 = vmatprep.subr.mxu0 0.0
    %1623 = vmatpush1.msra.mxu0 %v1603
    %1624 = vmatprep.subr.mxu0 0.0
    %1625 = vmatpush1.msra.mxu0 %v1604
    %1626 = vmatprep.subr.mxu0 0.0
    %1627 = vmatpush1.msra.mxu0 0.0
    %1628 = vmatprep.subr.mxu0 0.0
    %1629 = vmatpush1.msra.mxu0 0.0
    %1630 = vmatprep.subr.mxu0 0.0
    %1631 = vmatpush1.msra.mxu0 0.0
    %1632 = vmatprep.subr.mxu0 0.0
    %1633 = vmatpush1.msra.mxu0 0.0
    %1634 = vmatprep.subr.mxu0 0.0
    %1635 = vmatpush1.msra.mxu0 0.0
    %1636 = vmatprep.subr.mxu0 0.0
    %1637 = vmatpush1.msra.mxu0 0.0
    %1638 = vmatprep.subr.mxu0 0.0
    %1639 = vmatpush1.msra.mxu0 0.0
    %1640 = vmatprep.subr.mxu0 0.0
    %1641 = vmatpush1.msra.mxu0 0.0
    %1642 = vmatprep.subr.mxu0 0.0
    %1643 = vmatpush1.msra.mxu0 0.0
    %1644 = vmatprep.subr.mxu0 0.0
    %1645 = vmatpush1.msra.mxu0 0.0
    %1646 = vmatprep.subr.mxu0 0.0
    %1647 = vmatpush1.msra.mxu0 0.0
    %1648 = vmatprep.subr.mxu0 0.0
    %1649 = vmatpush1.msra.mxu0 0.0
    %1650 = vmatprep.subr.mxu0 0.0
    %1651 = vmatpush1.msra.mxu0 0.0
    %1652 = vmatprep.subr.mxu0 0.0
    %1653 = vmatpush1.msra.mxu0 0.0
    %1654 = vmatprep.subr.mxu0 0.0
    %1655 = vmatpush1.msra.mxu0 0.0
    %1656 = vmatprep.subr.mxu0 0.0
    %1657 = vmatpush1.msra.mxu0 0.0
    %1658 = vmatprep.subr.mxu0 0.0
    %1659 = vmatpush1.msra.mxu0 0.0
    %1660 = vmatprep.subr.mxu0 0.0
    %1661 = vmatpush1.msra.mxu0 0.0
    %1662 = vmatprep.subr.mxu0 0.0
    %1663 = vmatpush1.msra.mxu0 0.0
    %1664 = vmatprep.subr.mxu0 0.0
    %1665 = vmatpush1.msra.mxu0 0.0
    %1666 = vmatprep.subr.mxu0 0.0
    %1667 = vmatpush1.msra.mxu0 0.0
    %1668 = vmatprep.subr.mxu0 0.0
    %1669 = vmatpush1.msra.mxu0 0.0
    %1670 = vmatprep.subr.mxu0 0.0
    %1671 = vmatpush1.msra.mxu0 0.0
    %1672 = vmatprep.subr.mxu0 0.0
    %1673 = vmatpush1.msra.mxu0 0.0
    %1674 = vmatprep.subr.mxu0 0.0
    %1675 = vmatpush1.msra.mxu0 0.0
    %1676 = vmatprep.subr.mxu0 0.0
    %1677 = vmatpush1.msra.mxu0 0.0
    %1678 = vmatprep.subr.mxu0 0.0
    %1679 = vmatpush1.msra.mxu0 0.0
    %1680 = vmatprep.subr.mxu0 0.0
    %1681 = vmatpush1.msra.mxu0 0.0
    %1682 = vmatprep.mubr.f32.mxu0 0.0
    %1683 = vmatmul.mubr.f32.gmra.mrb[0].mxu0 %v1613
    %v1684 = vpop.f32.mrb[0].mxu0
    %v1685 = vadd.f32 %v1610, %v1684
    %v1686 = vpop.f32.mrb[0].mxu0
    %1687 = vmatprep.mubr.f32.mxu0 0.0
    %1688 = vmatmul.mubr.f32.gmra.mrb[0].mxu0 %v1616
    %v1689 = vpop.f32.mrb[0].mxu0
    %v1690 = vadd.f32 %v1610, %v1689
    %v1691 = vpop.f32.mrb[0].mxu0
    %1692 = vdwg.mxu0
    %v1693 = vmax.f32 %v1685, 0.0
    %v1694 = vmax.f32 %v1690, 0.0
    %vm1695 = vcmask 130048
    %1696 = vst.msk [vmem:[#allocation6] sm:$0xff] %vm1695, %v1693
    %1697 = vst.msk [vmem:[#allocation6 + $0x8] sm:$0xff] %vm1695, %v1694
    // Predicated region
    $region34: #{tpu_custom_call.1} parent=1 // pred_check
      _
    $region35: #{tpu_custom_call.1} parent=1 // pred_check_branch
      %1699 = sbr.rel (0) target = $region37
    $region36: #{tpu_custom_call.1} parent=1 // pred_region
      %s1701 = ssub.s32 256, 256
      %1702 = vsyncadd [#allocation5], %s1701
      %s1703 = sshll.u32 [#allocation6], 4
      %s1704 = int_to_ptr.vmem [resolvable:$true] %s1703
      %1709 = dma.vmem_to_hbm [thread:$0]  %s1704, 256, %s7, [#allocation5], 128, 128, 8
    $region37: #{tpu_custom_call.1} parent=1 // pred_fallthru
      _
    // Predicated region
    $region38: #{tpu_custom_call.1} parent=1 // pred_check
      _
    $region39: #{tpu_custom_call.1} parent=1 // pred_check_branch
      %1711 = sbr.rel (0) target = $region41
    $region40: #{tpu_custom_call.1} parent=1 // pred_region
      %1712 = dma.done [#allocation5], 256
    $region41: #{tpu_custom_call.1} parent=1 // pred_fallthru
      _
    %1713 = vsyncpa [#allocation4], 1
    %1714 = vsyncpa [#allocation5], 1

</llo_original>
